<compile_context>
chip_gen: v7x
topology: tpu7x:2x2x1
jax: 0.10.0
libtpu: 0.0.40
codegen_flags: <defaults>
</compile_context>

<pallas_src>
import jax
import jax.numpy as jnp
from jax.experimental import pallas as pl
from jax.experimental.pallas import tpu as pltpu


# ---------------------------------------------------------------------------
# Fused kernel: axial depthwise + 1x1 conv + folded BN + ReLU + 2x2 max pool
# ---------------------------------------------------------------------------
def encoder_kernel(xp_ref, dwp_ref, pws_ref, shift_ref, skip_ref, out_ref):
    # xp_ref block: (1, H, W2, 2C) -- W-paired NHWC layout:
    #   lanes [0, C)  hold column w = 2j   (even columns)
    #   lanes [C, 2C) hold column w = 2j+1 (odd columns)
    H = xp_ref.shape[1]
    W2 = xp_ref.shape[2]
    C = xp_ref.shape[3] // 2
    OC = pws_ref.shape[1]
    H2 = H // 2

    xp = xp_ref[0]                      # (H, W2, 2C)
    xe = xp[:, :, :C]                   # x[:, 2j,   :]  (H, W2, C)
    xo = xp[:, :, C:]                   # x[:, 2j+1, :]

    # Packed depthwise weights (folded in the wrapper), shape (8, C):
    #   row 0: wh[0]  (row h-1 tap)        row 1: wh[2]  (row h+1 tap)
    #   row 2: ww[0]  (col w-1 tap)        row 3: ww[2]  (col w+1 tap)
    #   row 4: 1 + wh[1] + ww[1]  (combined center)   row 5: bh + bw (bias)
    dwp = dwp_ref[...]
    wh_m, wh_p = dwp[0], dwp[1]
    ww_m, ww_p = dwp[2], dwp[3]
    wc, bax = dwp[4], dwp[5]

    # ---- +-1 row (H) shifts: slice + concat along the major dim (cheap) ----
    zr = jnp.zeros((1, W2, C), jnp.float32)
    xe_hm = jnp.concatenate([zr, xe[:H - 1]], axis=0)     # x[h-1, 2j]
    xe_hp = jnp.concatenate([xe[1:], zr], axis=0)         # x[h+1, 2j]
    xo_hm = jnp.concatenate([zr, xo[:H - 1]], axis=0)     # x[h-1, 2j+1]
    xo_hp = jnp.concatenate([xo[1:], zr], axis=0)         # x[h+1, 2j+1]

    # ---- +-1 column (W) shifts in the W-paired layout ----
    # even column 2j  : left neighbor = odd col of pair j-1, right = odd col of pair j
    # odd  column 2j+1: left neighbor = even col of pair j,  right = even col of pair j+1
    zc = jnp.zeros((H, 1, C), jnp.float32)
    xo_jm1 = jnp.concatenate([zc, xo[:, :W2 - 1, :]], axis=1)   # x[h, 2j-1] (0 at w=0)
    xe_jp1 = jnp.concatenate([xe[:, 1:, :], zc], axis=1)        # x[h, 2j+2] (0 at w=W-1)

    # ---- skip = x + dw_h(x) + dw_w(x), per column parity (center taps folded) ----
    skip_e = (wc * xe + wh_m * xe_hm + wh_p * xe_hp
              + ww_m * xo_jm1 + ww_p * xo + bax)
    skip_o = (wc * xo + wh_m * xo_hm + wh_p * xo_hp
              + ww_m * xe + ww_p * xe_jp1 + bax)
    # Store skip as one (H, W2, 2C) slab (wrapper reshapes back for free).
    skip_ref[0] = jnp.concatenate([skip_e, skip_o], axis=2)

    # ---- 1x1 conv (BN scale folded into pws; bias/mean/beta folded into shift) ----
    pws = pws_ref[...]                  # (C, OC)
    shift = shift_ref[0]                # (OC,)
    if C <= 16:
        # Tiny contraction: an MXU matmul would be >95% padding -> unrolled
        # broadcast-MAC over C on the VPU.  Seed with the BN shift.
        z_e = jnp.broadcast_to(shift, (H, W2, OC))
        z_o = jnp.broadcast_to(shift, (H, W2, OC))
        for c in range(C):
            z_e = z_e + skip_e[:, :, c:c + 1] * pws[c]
            z_o = z_o + skip_o[:, :, c:c + 1] * pws[c]
    else:
        # Larger channel counts: use the MXU.
        m = H * W2
        z_e = jnp.dot(skip_e.reshape(m, C), pws,
                      preferred_element_type=jnp.float32).reshape(H, W2, OC) + shift
        z_o = jnp.dot(skip_o.reshape(m, C), pws,
                      preferred_element_type=jnp.float32).reshape(H, W2, OC) + shift
    y_e = jnp.maximum(z_e, 0.0)         # ReLU(BN(pw(skip))) at even columns
    y_o = jnp.maximum(z_o, 0.0)         # ... at odd columns

    # ---- fused 2x2 max pool ----
    wmax = jnp.maximum(y_e, y_o)                        # pool across the W pair
    hpairs = wmax.reshape(H2, 2, W2, OC)                # leading-dim split (free)
    out_ref[0] = jnp.maximum(hpairs[:, 0], hpairs[:, 1])    # pool across the H pair


# ---------------------------------------------------------------------------
# Wrapper
# ---------------------------------------------------------------------------
def _block_vmem_bytes(shape, dtype_bytes=4):
    """VMEM bytes one buffer of this block occupies ((8,128)-padded minor dims)."""
    shape = tuple(int(d) for d in shape)
    if len(shape) == 1:
        shape = (1,) + shape
    lead = 1
    for d in shape[:-2]:
        lead *= d
    sub = -(-shape[-2] // 8) * 8
    lane = -(-shape[-1] // 128) * 128
    return lead * sub * lane * dtype_bytes


@jax.jit
def encoder_block_mamba2(x_nchw, params):
    B, C, H, W = x_nchw.shape
    OC = params["pw_w"].shape[1]
    # TODO(synk): PyTorch MaxPool2d((2,2)) floors odd spatial sizes; this kernel
    # assumes even H/W (true for the LiteMamba encoder pyramid).
    assert H % 2 == 0 and W % 2 == 0, "even H/W required"
    H2, W2 = H // 2, W // 2
    twoC = 2 * C

    # TODO(synk): CADmamba (self.resmamba) body is not provided in the reference
    # source, so resmamba is treated as identity (chunk + cat become a no-op).

    # NCHW -> NHWC, then pair adjacent W columns into the lane dim. The reshape is
    # contiguous and therefore free; no jnp.pad pass is needed (halo is in-kernel).
    x_pair = jnp.transpose(x_nchw, (0, 2, 3, 1)).reshape(B, H, W2, twoC)

    # Fold the depthwise weight algebra: identity + both center taps -> one coeff,
    # both biases -> one vector.  Pack into a single (8, C) slab (one tiny DMA).
    wh = params["wh"]                               # (3, C)
    ww = params["ww"]                               # (3, C)
    bax = params["bax"][0]                          # (C,)
    wc = 1.0 + wh[1] + ww[1]
    zero = jnp.zeros_like(wc)
    dwp = jnp.stack([wh[0], wh[2], ww[0], ww[2], wc, bax, zero, zero], axis=0)  # (8, C)

    # Fold the inference-mode BN scale into the 1x1 weights.
    pws = params["pw_w"] * params["scale"]          # (C, OC)
    shift = params["shift"]                         # (1, OC)

    # Size the scoped VMEM limit from the actual (double-buffered) blocks.
    block_shapes = [
        (1, H, W2, twoC),                           # x
        (8, C), (C, OC), (1, OC),                   # weights
        (1, H, W2, twoC),                           # skip out
        (1, H2, W2, OC),                            # pooled out
    ]
    vmem_needed = 2 * sum(_block_vmem_bytes(s) for s in block_shapes)
    vmem_limit = int(min(64 * 1024 * 1024,
                         max(vmem_needed + (8 << 20), 32 * 1024 * 1024)))

    skip_pair, pooled = pl.pallas_call(
        encoder_kernel,
        out_shape=(
            jax.ShapeDtypeStruct((B, H, W2, twoC), jnp.float32),
            jax.ShapeDtypeStruct((B, H2, W2, OC), jnp.float32),
        ),
        grid_spec=pltpu.PrefetchScalarGridSpec(
            num_scalar_prefetch=0,
            grid=(B,),
            in_specs=[
                pl.BlockSpec((1, H, W2, twoC), lambda b: (b, 0, 0, 0)),
                pl.BlockSpec((8, C), lambda b: (0, 0)),
                pl.BlockSpec((C, OC), lambda b: (0, 0)),
                pl.BlockSpec((1, OC), lambda b: (0, 0)),
            ],
            out_specs=[
                pl.BlockSpec((1, H, W2, twoC), lambda b: (b, 0, 0, 0)),
                pl.BlockSpec((1, H2, W2, OC), lambda b: (b, 0, 0, 0)),
            ],
        ),
        compiler_params=pltpu.CompilerParams(
            dimension_semantics=("parallel",),
            vmem_limit_bytes=vmem_limit,
        ),
    )(x_pair, dwp, pws, shift)

    out_nchw = jnp.transpose(pooled, (0, 3, 1, 2))                          # (B, OC, H/2, W/2)
    skip_nchw = jnp.transpose(skip_pair.reshape(B, H, W, C), (0, 3, 1, 2))  # (B, C, H, W)
    return out_nchw, skip_nchw


# ---------------------------------------------------------------------------
# Deterministic parameter init (shapes follow the PyTorch __init__)
# ---------------------------------------------------------------------------
def init_params(key, in_c, out_c):
    ks = jax.random.split(key, 8)
    # dw_h: Conv2d(in_c, in_c, (3,1), groups=in_c) -> (in_c, 1, 3, 1) == (3, in_c)
    wh = 0.3 * jax.random.normal(ks[0], (3, in_c), jnp.float32)
    bh = 0.1 * jax.random.normal(ks[1], (in_c,), jnp.float32)
    # dw_w: Conv2d(in_c, in_c, (1,3), groups=in_c) -> (in_c, 1, 1, 3) == (3, in_c)
    ww = 0.3 * jax.random.normal(ks[2], (3, in_c), jnp.float32)
    bw = 0.1 * jax.random.normal(ks[3], (in_c,), jnp.float32)
    # pw: Conv2d(in_c, out_c, 1) -> weight (out_c, in_c, 1, 1) == (in_c, out_c) here
    pw_w = jax.random.normal(ks[4], (in_c, out_c), jnp.float32) / jnp.sqrt(in_c)
    pw_b = 0.1 * jax.random.normal(ks[5], (out_c,), jnp.float32)
    # BatchNorm2d(out_c): inference-mode semantics, folded into scale/shift.
    gamma = 1.0 + 0.1 * jax.random.normal(ks[6], (out_c,), jnp.float32)
    beta = 0.1 * jax.random.normal(ks[7], (out_c,), jnp.float32)
    run_mean = jnp.zeros((out_c,), jnp.float32)
    run_var = jnp.ones((out_c,), jnp.float32)
    eps = 1e-5

    scale = gamma / jnp.sqrt(run_var + eps)
    shift = (pw_b - run_mean) * scale + beta
    bax = bh + bw   # both axial-conv biases are simply added in skip
    return {
        "wh": wh,
        "ww": ww,
        "bax": bax.reshape(1, in_c),
        "pw_w": pw_w,
        "scale": scale.reshape(1, out_c),
        "shift": shift.reshape(1, out_c),
    }


# ---------------------------------------------------------------------------
# Pure-JAX reference for verification
# ---------------------------------------------------------------------------
def reference(x_nchw, p):
    x = jnp.transpose(x_nchw, (0, 2, 3, 1))
    B, H, W, C = x.shape
    xp = jnp.pad(x, ((0, 0), (1, 1), (1, 1), (0, 0)))
    xc = xp[:, 1:H + 1, 1:W + 1]
    hm = xp[:, 0:H, 1:W + 1]
    hp = xp[:, 2:H + 2, 1:W + 1]
    wm = xp[:, 1:H + 1, 0:W]
    wp = xp[:, 1:H + 1, 2:W + 2]
    hconv = p["wh"][0] * hm + p["wh"][1] * xc + p["wh"][2] * hp
    wconv = p["ww"][0] * wm + p["ww"][1] * xc + p["ww"][2] * wp
    skip = xc + hconv + wconv + p["bax"][0]
    z = jnp.einsum("bhwc,co->bhwo", skip, p["pw_w"])
    y = jnp.maximum(z * p["scale"][0] + p["shift"][0], 0.0)
    H2, W2 = H // 2, W // 2
    pooled = y.reshape(B, H2, 2, W2, 2, -1).max(axis=(2, 4))
    return jnp.transpose(pooled, (0, 3, 1, 2)), jnp.transpose(skip, (0, 3, 1, 2))


if __name__ == "__main__":
    B, IN_C, OUT_C, H, W = 2, 4, 8, 16, 16

    key = jax.random.PRNGKey(0)
    k_x, k_p = jax.random.split(key)
    x = jax.random.normal(k_x, (B, IN_C, H, W), jnp.float32)
    params = init_params(k_p, IN_C, OUT_C)

    out, skip = encoder_block_mamba2(x, params)
    out = jax.block_until_ready(out)
    skip = jax.block_until_ready(skip)

    ref_out, ref_skip = reference(x, params)
    assert out.shape == (B, OUT_C, H // 2, W // 2)
    assert skip.shape == (B, IN_C, H, W)
    assert jnp.allclose(out, ref_out, rtol=1e-3, atol=1e-3), "pooled output mismatch"
    assert jnp.allclose(skip, ref_skip, rtol=1e-3, atol=1e-3), "skip output mismatch"

    print("KERNEL_OK")
</pallas_src>

<mosaic_0001>
module attributes {stable_mosaic.version = 11 : i64} {
  func.func @encoder_kernel(%arg0: i32, %arg1: memref<1x16x8x8xf32, #tpu.memory_space<vmem>>, %arg2: memref<8x4xf32, #tpu.memory_space<vmem>>, %arg3: memref<4x8xf32, #tpu.memory_space<vmem>>, %arg4: memref<1x8xf32, #tpu.memory_space<vmem>>, %arg5: memref<1x16x8x8xf32, #tpu.memory_space<vmem>>, %arg6: memref<1x8x8x8xf32, #tpu.memory_space<vmem>>) attributes {dimension_semantics = [#tpu.dimension_semantics<parallel>], iteration_bounds = array<i64: 2>, scalar_prefetch = 0 : i64, scratch_operands = 0 : i64, tpu.core_type = #tpu.core_type<tc>, window_params = [{transform_indices = @transform_0, window_bounds = array<i64: 1, 16, 8, 8>}, {pipeline_mode = #tpu.pipeline_mode<synchronous>, transform_indices = @transform_1, window_bounds = array<i64: 8, 4>}, {pipeline_mode = #tpu.pipeline_mode<synchronous>, transform_indices = @transform_2, window_bounds = array<i64: 4, 8>}, {pipeline_mode = #tpu.pipeline_mode<synchronous>, transform_indices = @transform_3, window_bounds = array<i64: 1, 8>}, {transform_indices = @transform_4, window_bounds = array<i64: 1, 16, 8, 8>}, {transform_indices = @transform_5, window_bounds = array<i64: 1, 8, 8, 8>}]} {
    %c0 = arith.constant 0 : index
    %c0_0 = arith.constant 0 : index
    %c0_1 = arith.constant 0 : index
    %c0_2 = arith.constant 0 : index
    %0 = vector.load %arg1[%c0, %c0_0, %c0_1, %c0_2] : memref<1x16x8x8xf32, #tpu.memory_space<vmem>>, vector<1x16x8x8xf32>
    %1 = vector.shape_cast %0 : vector<1x16x8x8xf32> to vector<16x8x8xf32>
    %2 = vector.extract_strided_slice %1 {offsets = [0, 0, 0], sizes = [16, 8, 4], strides = [1, 1, 1]} : vector<16x8x8xf32> to vector<16x8x4xf32>
    %3 = vector.extract_strided_slice %1 {offsets = [0, 0, 4], sizes = [16, 8, 4], strides = [1, 1, 1]} : vector<16x8x8xf32> to vector<16x8x4xf32>
    %c0_3 = arith.constant 0 : index
    %c0_4 = arith.constant 0 : index
    %4 = vector.load %arg2[%c0_3, %c0_4] : memref<8x4xf32, #tpu.memory_space<vmem>>, vector<8x4xf32>
    %5 = vector.extract_strided_slice %4 {offsets = [0, 0], sizes = [1, 4], strides = [1, 1]} : vector<8x4xf32> to vector<1x4xf32>
    %6 = vector.shape_cast %5 : vector<1x4xf32> to vector<4xf32>
    %7 = vector.extract_strided_slice %4 {offsets = [1, 0], sizes = [1, 4], strides = [1, 1]} : vector<8x4xf32> to vector<1x4xf32>
    %8 = vector.shape_cast %7 : vector<1x4xf32> to vector<4xf32>
    %9 = vector.extract_strided_slice %4 {offsets = [2, 0], sizes = [1, 4], strides = [1, 1]} : vector<8x4xf32> to vector<1x4xf32>
    %10 = vector.shape_cast %9 : vector<1x4xf32> to vector<4xf32>
    %11 = vector.extract_strided_slice %4 {offsets = [3, 0], sizes = [1, 4], strides = [1, 1]} : vector<8x4xf32> to vector<1x4xf32>
    %12 = vector.shape_cast %11 : vector<1x4xf32> to vector<4xf32>
    %13 = vector.extract_strided_slice %4 {offsets = [4, 0], sizes = [1, 4], strides = [1, 1]} : vector<8x4xf32> to vector<1x4xf32>
    %14 = vector.shape_cast %13 : vector<1x4xf32> to vector<4xf32>
    %15 = vector.extract_strided_slice %4 {offsets = [5, 0], sizes = [1, 4], strides = [1, 1]} : vector<8x4xf32> to vector<1x4xf32>
    %16 = vector.shape_cast %15 : vector<1x4xf32> to vector<4xf32>
    %cst = arith.constant 0.000000e+00 : f32
    %17 = vector.broadcast %cst : f32 to vector<1x8x4xf32>
    %18 = vector.extract_strided_slice %2 {offsets = [0, 0, 0], sizes = [15, 8, 4], strides = [1, 1, 1]} : vector<16x8x4xf32> to vector<15x8x4xf32>
    %19 = tpu.concatenate %17, %18 in 0 : vector<1x8x4xf32>, vector<15x8x4xf32> -> vector<16x8x4xf32>
    %20 = vector.extract_strided_slice %2 {offsets = [1, 0, 0], sizes = [15, 8, 4], strides = [1, 1, 1]} : vector<16x8x4xf32> to vector<15x8x4xf32>
    %21 = tpu.concatenate %20, %17 in 0 : vector<15x8x4xf32>, vector<1x8x4xf32> -> vector<16x8x4xf32>
    %22 = vector.extract_strided_slice %3 {offsets = [0, 0, 0], sizes = [15, 8, 4], strides = [1, 1, 1]} : vector<16x8x4xf32> to vector<15x8x4xf32>
    %23 = tpu.concatenate %17, %22 in 0 : vector<1x8x4xf32>, vector<15x8x4xf32> -> vector<16x8x4xf32>
    %24 = vector.extract_strided_slice %3 {offsets = [1, 0, 0], sizes = [15, 8, 4], strides = [1, 1, 1]} : vector<16x8x4xf32> to vector<15x8x4xf32>
    %25 = tpu.concatenate %24, %17 in 0 : vector<15x8x4xf32>, vector<1x8x4xf32> -> vector<16x8x4xf32>
    %cst_5 = arith.constant 0.000000e+00 : f32
    %26 = vector.broadcast %cst_5 : f32 to vector<16x1x4xf32>
    %27 = vector.extract_strided_slice %3 {offsets = [0, 0, 0], sizes = [16, 7, 4], strides = [1, 1, 1]} : vector<16x8x4xf32> to vector<16x7x4xf32>
    %28 = tpu.concatenate %26, %27 in 1 : vector<16x1x4xf32>, vector<16x7x4xf32> -> vector<16x8x4xf32>
    %29 = vector.extract_strided_slice %2 {offsets = [0, 1, 0], sizes = [16, 7, 4], strides = [1, 1, 1]} : vector<16x8x4xf32> to vector<16x7x4xf32>
    %30 = tpu.concatenate %29, %26 in 1 : vector<16x7x4xf32>, vector<16x1x4xf32> -> vector<16x8x4xf32>
    %31 = vector.shape_cast %14 : vector<4xf32> to vector<1x1x4xf32>
    %32 = vector.broadcast %31 : vector<1x1x4xf32> to vector<16x8x4xf32>
    %33 = arith.mulf %32, %2 : vector<16x8x4xf32>
    %34 = vector.shape_cast %6 : vector<4xf32> to vector<1x1x4xf32>
    %35 = vector.broadcast %34 : vector<1x1x4xf32> to vector<16x8x4xf32>
    %36 = arith.mulf %35, %19 : vector<16x8x4xf32>
    %37 = arith.addf %33, %36 : vector<16x8x4xf32>
    %38 = vector.shape_cast %8 : vector<4xf32> to vector<1x1x4xf32>
    %39 = vector.broadcast %38 : vector<1x1x4xf32> to vector<16x8x4xf32>
    %40 = arith.mulf %39, %21 : vector<16x8x4xf32>
    %41 = arith.addf %37, %40 : vector<16x8x4xf32>
    %42 = vector.shape_cast %10 : vector<4xf32> to vector<1x1x4xf32>
    %43 = vector.broadcast %42 : vector<1x1x4xf32> to vector<16x8x4xf32>
    %44 = arith.mulf %43, %28 : vector<16x8x4xf32>
    %45 = arith.addf %41, %44 : vector<16x8x4xf32>
    %46 = vector.shape_cast %12 : vector<4xf32> to vector<1x1x4xf32>
    %47 = vector.broadcast %46 : vector<1x1x4xf32> to vector<16x8x4xf32>
    %48 = arith.mulf %47, %3 : vector<16x8x4xf32>
    %49 = arith.addf %45, %48 : vector<16x8x4xf32>
    %50 = vector.shape_cast %16 : vector<4xf32> to vector<1x1x4xf32>
    %51 = vector.broadcast %50 : vector<1x1x4xf32> to vector<16x8x4xf32>
    %52 = arith.addf %49, %51 : vector<16x8x4xf32>
    %53 = vector.shape_cast %14 : vector<4xf32> to vector<1x1x4xf32>
    %54 = vector.broadcast %53 : vector<1x1x4xf32> to vector<16x8x4xf32>
    %55 = arith.mulf %54, %3 : vector<16x8x4xf32>
    %56 = vector.shape_cast %6 : vector<4xf32> to vector<1x1x4xf32>
    %57 = vector.broadcast %56 : vector<1x1x4xf32> to vector<16x8x4xf32>
    %58 = arith.mulf %57, %23 : vector<16x8x4xf32>
    %59 = arith.addf %55, %58 : vector<16x8x4xf32>
    %60 = vector.shape_cast %8 : vector<4xf32> to vector<1x1x4xf32>
    %61 = vector.broadcast %60 : vector<1x1x4xf32> to vector<16x8x4xf32>
    %62 = arith.mulf %61, %25 : vector<16x8x4xf32>
    %63 = arith.addf %59, %62 : vector<16x8x4xf32>
    %64 = vector.shape_cast %10 : vector<4xf32> to vector<1x1x4xf32>
    %65 = vector.broadcast %64 : vector<1x1x4xf32> to vector<16x8x4xf32>
    %66 = arith.mulf %65, %2 : vector<16x8x4xf32>
    %67 = arith.addf %63, %66 : vector<16x8x4xf32>
    %68 = vector.shape_cast %12 : vector<4xf32> to vector<1x1x4xf32>
    %69 = vector.broadcast %68 : vector<1x1x4xf32> to vector<16x8x4xf32>
    %70 = arith.mulf %69, %30 : vector<16x8x4xf32>
    %71 = arith.addf %67, %70 : vector<16x8x4xf32>
    %72 = vector.shape_cast %16 : vector<4xf32> to vector<1x1x4xf32>
    %73 = vector.broadcast %72 : vector<1x1x4xf32> to vector<16x8x4xf32>
    %74 = arith.addf %71, %73 : vector<16x8x4xf32>
    %75 = tpu.concatenate %52, %74 in 2 : vector<16x8x4xf32>, vector<16x8x4xf32> -> vector<16x8x8xf32>
    %c0_6 = arith.constant 0 : index
    %c0_7 = arith.constant 0 : index
    %c0_8 = arith.constant 0 : index
    %c0_9 = arith.constant 0 : index
    %76 = vector.load %arg5[%c0_6, %c0_7, %c0_8, %c0_9] : memref<1x16x8x8xf32, #tpu.memory_space<vmem>>, vector<1x16x8x8xf32>
    %77 = vector.shape_cast %76 : vector<1x16x8x8xf32> to vector<16x8x8xf32>
    %78 = vector.shape_cast %75 : vector<16x8x8xf32> to vector<1x16x8x8xf32>
    tpu.vector_store %arg5[%c0_6, %c0_7, %c0_8, %c0_9], %78 {strides = array<i32>} : memref<1x16x8x8xf32, #tpu.memory_space<vmem>>, vector<1x16x8x8xf32>,
    %c0_10 = arith.constant 0 : index
    %c0_11 = arith.constant 0 : index
    %79 = vector.load %arg3[%c0_10, %c0_11] : memref<4x8xf32, #tpu.memory_space<vmem>>, vector<4x8xf32>
    %c0_12 = arith.constant 0 : index
    %c0_13 = arith.constant 0 : index
    %80 = vector.load %arg4[%c0_12, %c0_13] : memref<1x8xf32, #tpu.memory_space<vmem>>, vector<1x8xf32>
    %81 = vector.shape_cast %80 : vector<1x8xf32> to vector<8xf32>
    %82 = vector.shape_cast %81 : vector<8xf32> to vector<1x1x8xf32>
    %83 = vector.broadcast %82 : vector<1x1x8xf32> to vector<16x8x8xf32>
    %84 = vector.shape_cast %81 : vector<8xf32> to vector<1x1x8xf32>
    %85 = vector.broadcast %84 : vector<1x1x8xf32> to vector<16x8x8xf32>
    %86 = vector.extract_strided_slice %52 {offsets = [0, 0, 0], sizes = [16, 8, 1], strides = [1, 1, 1]} : vector<16x8x4xf32> to vector<16x8x1xf32>
    %87 = vector.extract_strided_slice %79 {offsets = [0, 0], sizes = [1, 8], strides = [1, 1]} : vector<4x8xf32> to vector<1x8xf32>
    %88 = vector.shape_cast %87 : vector<1x8xf32> to vector<8xf32>
    %89 = vector.shape_cast %88 : vector<8xf32> to vector<1x1x8xf32>
    %90 = vector.broadcast %86 : vector<16x8x1xf32> to vector<16x8x8xf32>
    %91 = vector.broadcast %89 : vector<1x1x8xf32> to vector<16x8x8xf32>
    %92 = arith.mulf %90, %91 : vector<16x8x8xf32>
    %93 = arith.addf %83, %92 : vector<16x8x8xf32>
    %94 = vector.extract_strided_slice %74 {offsets = [0, 0, 0], sizes = [16, 8, 1], strides = [1, 1, 1]} : vector<16x8x4xf32> to vector<16x8x1xf32>
    %95 = vector.extract_strided_slice %79 {offsets = [0, 0], sizes = [1, 8], strides = [1, 1]} : vector<4x8xf32> to vector<1x8xf32>
    %96 = vector.shape_cast %95 : vector<1x8xf32> to vector<8xf32>
    %97 = vector.shape_cast %96 : vector<8xf32> to vector<1x1x8xf32>
    %98 = vector.broadcast %94 : vector<16x8x1xf32> to vector<16x8x8xf32>
    %99 = vector.broadcast %97 : vector<1x1x8xf32> to vector<16x8x8xf32>
    %100 = arith.mulf %98, %99 : vector<16x8x8xf32>
    %101 = arith.addf %85, %100 : vector<16x8x8xf32>
    %102 = vector.extract_strided_slice %52 {offsets = [0, 0, 1], sizes = [16, 8, 1], strides = [1, 1, 1]} : vector<16x8x4xf32> to vector<16x8x1xf32>
    %103 = vector.extract_strided_slice %79 {offsets = [1, 0], sizes = [1, 8], strides = [1, 1]} : vector<4x8xf32> to vector<1x8xf32>
    %104 = vector.shape_cast %103 : vector<1x8xf32> to vector<8xf32>
    %105 = vector.shape_cast %104 : vector<8xf32> to vector<1x1x8xf32>
    %106 = vector.broadcast %102 : vector<16x8x1xf32> to vector<16x8x8xf32>
    %107 = vector.broadcast %105 : vector<1x1x8xf32> to vector<16x8x8xf32>
    %108 = arith.mulf %106, %107 : vector<16x8x8xf32>
    %109 = arith.addf %93, %108 : vector<16x8x8xf32>
    %110 = vector.extract_strided_slice %74 {offsets = [0, 0, 1], sizes = [16, 8, 1], strides = [1, 1, 1]} : vector<16x8x4xf32> to vector<16x8x1xf32>
    %111 = vector.extract_strided_slice %79 {offsets = [1, 0], sizes = [1, 8], strides = [1, 1]} : vector<4x8xf32> to vector<1x8xf32>
    %112 = vector.shape_cast %111 : vector<1x8xf32> to vector<8xf32>
    %113 = vector.shape_cast %112 : vector<8xf32> to vector<1x1x8xf32>
    %114 = vector.broadcast %110 : vector<16x8x1xf32> to vector<16x8x8xf32>
    %115 = vector.broadcast %113 : vector<1x1x8xf32> to vector<16x8x8xf32>
    %116 = arith.mulf %114, %115 : vector<16x8x8xf32>
    %117 = arith.addf %101, %116 : vector<16x8x8xf32>
    %118 = vector.extract_strided_slice %52 {offsets = [0, 0, 2], sizes = [16, 8, 1], strides = [1, 1, 1]} : vector<16x8x4xf32> to vector<16x8x1xf32>
    %119 = vector.extract_strided_slice %79 {offsets = [2, 0], sizes = [1, 8], strides = [1, 1]} : vector<4x8xf32> to vector<1x8xf32>
    %120 = vector.shape_cast %119 : vector<1x8xf32> to vector<8xf32>
    %121 = vector.shape_cast %120 : vector<8xf32> to vector<1x1x8xf32>
    %122 = vector.broadcast %118 : vector<16x8x1xf32> to vector<16x8x8xf32>
    %123 = vector.broadcast %121 : vector<1x1x8xf32> to vector<16x8x8xf32>
    %124 = arith.mulf %122, %123 : vector<16x8x8xf32>
    %125 = arith.addf %109, %124 : vector<16x8x8xf32>
    %126 = vector.extract_strided_slice %74 {offsets = [0, 0, 2], sizes = [16, 8, 1], strides = [1, 1, 1]} : vector<16x8x4xf32> to vector<16x8x1xf32>
    %127 = vector.extract_strided_slice %79 {offsets = [2, 0], sizes = [1, 8], strides = [1, 1]} : vector<4x8xf32> to vector<1x8xf32>
    %128 = vector.shape_cast %127 : vector<1x8xf32> to vector<8xf32>
    %129 = vector.shape_cast %128 : vector<8xf32> to vector<1x1x8xf32>
    %130 = vector.broadcast %126 : vector<16x8x1xf32> to vector<16x8x8xf32>
    %131 = vector.broadcast %129 : vector<1x1x8xf32> to vector<16x8x8xf32>
    %132 = arith.mulf %130, %131 : vector<16x8x8xf32>
    %133 = arith.addf %117, %132 : vector<16x8x8xf32>
    %134 = vector.extract_strided_slice %52 {offsets = [0, 0, 3], sizes = [16, 8, 1], strides = [1, 1, 1]} : vector<16x8x4xf32> to vector<16x8x1xf32>
    %135 = vector.extract_strided_slice %79 {offsets = [3, 0], sizes = [1, 8], strides = [1, 1]} : vector<4x8xf32> to vector<1x8xf32>
    %136 = vector.shape_cast %135 : vector<1x8xf32> to vector<8xf32>
    %137 = vector.shape_cast %136 : vector<8xf32> to vector<1x1x8xf32>
    %138 = vector.broadcast %134 : vector<16x8x1xf32> to vector<16x8x8xf32>
    %139 = vector.broadcast %137 : vector<1x1x8xf32> to vector<16x8x8xf32>
    %140 = arith.mulf %138, %139 : vector<16x8x8xf32>
    %141 = arith.addf %125, %140 : vector<16x8x8xf32>
    %142 = vector.extract_strided_slice %74 {offsets = [0, 0, 3], sizes = [16, 8, 1], strides = [1, 1, 1]} : vector<16x8x4xf32> to vector<16x8x1xf32>
    %143 = vector.extract_strided_slice %79 {offsets = [3, 0], sizes = [1, 8], strides = [1, 1]} : vector<4x8xf32> to vector<1x8xf32>
    %144 = vector.shape_cast %143 : vector<1x8xf32> to vector<8xf32>
    %145 = vector.shape_cast %144 : vector<8xf32> to vector<1x1x8xf32>
    %146 = vector.broadcast %142 : vector<16x8x1xf32> to vector<16x8x8xf32>
    %147 = vector.broadcast %145 : vector<1x1x8xf32> to vector<16x8x8xf32>
    %148 = arith.mulf %146, %147 : vector<16x8x8xf32>
    %149 = arith.addf %133, %148 : vector<16x8x8xf32>
    %cst_14 = arith.constant 0.000000e+00 : f32
    %150 = vector.broadcast %cst_14 : f32 to vector<16x8x8xf32>
    %151 = arith.maximumf %141, %150 : vector<16x8x8xf32>
    %cst_15 = arith.constant 0.000000e+00 : f32
    %152 = vector.broadcast %cst_15 : f32 to vector<16x8x8xf32>
    %153 = arith.maximumf %149, %152 : vector<16x8x8xf32>
    %154 = arith.maximumf %151, %153 : vector<16x8x8xf32>
    %155 = vector.shape_cast %154 : vector<16x8x8xf32> to vector<8x2x8x8xf32>
    %156 = vector.extract_strided_slice %155 {offsets = [0, 0, 0, 0], sizes = [8, 1, 8, 8], strides = [1, 1, 1, 1]} : vector<8x2x8x8xf32> to vector<8x1x8x8xf32>
    %157 = vector.shape_cast %156 : vector<8x1x8x8xf32> to vector<8x8x8xf32>
    %158 = vector.extract_strided_slice %155 {offsets = [0, 1, 0, 0], sizes = [8, 1, 8, 8], strides = [1, 1, 1, 1]} : vector<8x2x8x8xf32> to vector<8x1x8x8xf32>
    %159 = vector.shape_cast %158 : vector<8x1x8x8xf32> to vector<8x8x8xf32>
    %160 = arith.maximumf %157, %159 : vector<8x8x8xf32>
    %c0_16 = arith.constant 0 : index
    %c0_17 = arith.constant 0 : index
    %c0_18 = arith.constant 0 : index
    %c0_19 = arith.constant 0 : index
    %161 = vector.load %arg6[%c0_16, %c0_17, %c0_18, %c0_19] : memref<1x8x8x8xf32, #tpu.memory_space<vmem>>, vector<1x8x8x8xf32>
    %162 = vector.shape_cast %161 : vector<1x8x8x8xf32> to vector<8x8x8xf32>
    %163 = vector.shape_cast %160 : vector<8x8x8xf32> to vector<1x8x8x8xf32>
    tpu.vector_store %arg6[%c0_16, %c0_17, %c0_18, %c0_19], %163 {strides = array<i32>} : memref<1x8x8x8xf32, #tpu.memory_space<vmem>>, vector<1x8x8x8xf32>,
    return
  }
  func.func @transform_0(%arg0: i32) -> (i32, i32, i32, i32) {
    %c0_i32 = arith.constant 0 : i32
    %c0_i32_0 = arith.constant 0 : i32
    %c0_i32_1 = arith.constant 0 : i32
    %c0_i32_2 = arith.constant 0 : i32
    return %arg0, %c0_i32, %c0_i32_0, %c0_i32_1 : i32, i32, i32, i32
  }
  func.func @transform_1(%arg0: i32) -> (i32, i32) {
    %c0_i32 = arith.constant 0 : i32
    %c0_i32_0 = arith.constant 0 : i32
    %c0_i32_1 = arith.constant 0 : i32
    return %c0_i32, %c0_i32_0 : i32, i32
  }
  func.func @transform_2(%arg0: i32) -> (i32, i32) {
    %c0_i32 = arith.constant 0 : i32
    %c0_i32_0 = arith.constant 0 : i32
    %c0_i32_1 = arith.constant 0 : i32
    return %c0_i32, %c0_i32_0 : i32, i32
  }
  func.func @transform_3(%arg0: i32) -> (i32, i32) {
    %c0_i32 = arith.constant 0 : i32
    %c0_i32_0 = arith.constant 0 : i32
    %c0_i32_1 = arith.constant 0 : i32
    return %c0_i32, %c0_i32_0 : i32, i32
  }
  func.func @transform_4(%arg0: i32) -> (i32, i32, i32, i32) {
    %c0_i32 = arith.constant 0 : i32
    %c0_i32_0 = arith.constant 0 : i32
    %c0_i32_1 = arith.constant 0 : i32
    %c0_i32_2 = arith.constant 0 : i32
    return %arg0, %c0_i32, %c0_i32_0, %c0_i32_1 : i32, i32, i32, i32
  }
  func.func @transform_5(%arg0: i32) -> (i32, i32, i32, i32) {
    %c0_i32 = arith.constant 0 : i32
    %c0_i32_0 = arith.constant 0 : i32
    %c0_i32_1 = arith.constant 0 : i32
    %c0_i32_2 = arith.constant 0 : i32
    return %arg0, %c0_i32, %c0_i32_0, %c0_i32_1 : i32, i32, i32, i32
  }
}

</mosaic_0001>

<llo_original>
// kernel: encoder_block_mamba2.1
$region0: #{encoder_block_mamba2.1}
  #allocation0 [shape = 'u32[]', space=smem, size = 0x4, offset = 0x4, fixed_abs, tag = 'smem constant byte address 0x4 - core index']
  #allocation1 [shape = 'u32[144,128]{1,0:T(1,128)}', space=vmem, size = 0x12000, scoped, tag = 'internal scratch']
  %s0 = inlined_call_operand.vmem [shape: f32[2,16,8,8], index: 0, kind: input, shape index: {}]
  %s1 = inlined_call_operand.vmem [shape: f32[8,4], index: 1, kind: input, shape index: {}]
  %s2 = inlined_call_operand.vmem [shape: f32[4,8], index: 2, kind: input, shape index: {}]
  %s3 = inlined_call_operand.vmem [shape: f32[1,8], index: 3, kind: input, shape index: {}]
  %s4 = inlined_call_operand.vmem [shape: f32[2,16,8,8], index: 4, kind: output, shape index: {0}]
  %s5 = inlined_call_operand.vmem [shape: f32[2,8,8,8], index: 5, kind: output, shape index: {1}]
  %6 = xla_tuple %s4, %s5
  %s7 = sld [smem:[#allocation0]]
  $region57: #{encoder_block_mamba2.1} parent=0
    _
  %s9 = ssub.s32 1, %s7
  %s10 = scalar_select 0, %s9, %s7
  loop: start=0, step=1, limit=4
  $region2: #{encoder_block_mamba2.1} parent=0 // loop_pre_header
    _
  $region3: #{encoder_block_mamba2.1} parent=0 // loop_header
    %s12 = sphi 0, %s16
    %p13 = scmp.ge.s32.totalorder %s12, 4
    %s22 = sphi 0, %s24
    %s25 = sphi 0, %s22
    %s26 = sphi 0, %s25
    %s42 = sphi 0, %s26
    %s46 = sphi 0, %s46
    %s48 = sphi 0, %s46
    %s49 = sphi 0, %s48
    %s63 = sphi 0, %s49
    %s67 = sphi 0, %s67
    %s69 = sphi 0, %s67
    %s70 = sphi 0, %s69
    %s84 = sphi 0, %s70
    %s88 = sphi 0, %s88
    %s90 = sphi 0, %s88
    %s91 = sphi 0, %s90
    %s105 = sphi 0, %s91
    %s111 = sphi 0, %s113
    %s114 = sphi 0, %s111
    %s115 = sphi 0, %s114
    %s131 = sphi 0, %s115
    %s137 = sphi 0, %s139
    %s140 = sphi 0, %s137
    %s141 = sphi 0, %s140
    %s157 = sphi 0, %s141
  $region4: #{encoder_block_mamba2.1} parent=0 // loop_header_branch
    %15 = sbr.rel (%p13) target = $region8
  $region5: #{encoder_block_mamba2.1} parent=0 // loop_body
    %s17 = ssub.s32 %s12, 1
    %s18 = ssub.s32 %s12, 2
    %s19 = sadd.s32 %s12, 1
    %s20 = ssub.s32 %s12, %s19
    %p21 = scmp.eq.s32.totalorder %s20, 0
    %s23 = sadd.s32 %s22, 1
    %s24 = scalar_select %p21, %s22, %s23
    %p27 = pneg %p21
    %p28 = scmp.eq.s32.totalorder %s12, 1
    %p29 = por %p27, %p28
    %p30 = scmp.ne.s32.totalorder %s22, %s25
    %p31 = scmp.eq.s32.totalorder %s12, 0
    %p32 = por %p30, %p31
    %p33 = scmp.ne.s32.totalorder %s22, %s25
    %p34 = scmp.eq.s32.totalorder %s17, 1
    %p35 = por %p33, %p34
    %p36 = scmp.ne.s32.totalorder %s25, %s26
    %p37 = scmp.eq.s32.totalorder %s17, 0
    %p38 = por %p36, %p37
    %p39 = scmp.ne.s32.totalorder %s25, %s26
    %p40 = scmp.eq.s32.totalorder %s18, 1
    %p41 = por %p39, %p40
    %p43 = scmp.ne.s32.totalorder %s26, %s42
    %p44 = scmp.eq.s32.totalorder %s18, 0
    %p45 = por %p43, %p44
    %s47 = sadd.s32 %s46, 1
    %p50 = scmp.eq.s32.totalorder %s12, 1
    %p51 = scmp.ne.s32.totalorder %s46, %s48
    %p52 = scmp.eq.s32.totalorder %s12, 0
    %p53 = por %p51, %p52
    %p54 = scmp.ne.s32.totalorder %s46, %s48
    %p55 = scmp.eq.s32.totalorder %s17, 1
    %p56 = por %p54, %p55
    %p57 = scmp.ne.s32.totalorder %s48, %s49
    %p58 = scmp.eq.s32.totalorder %s17, 0
    %p59 = por %p57, %p58
    %p60 = scmp.ne.s32.totalorder %s48, %s49
    %p61 = scmp.eq.s32.totalorder %s18, 1
    %p62 = por %p60, %p61
    %p64 = scmp.ne.s32.totalorder %s49, %s63
    %p65 = scmp.eq.s32.totalorder %s18, 0
    %p66 = por %p64, %p65
    %s68 = sadd.s32 %s67, 1
    %p71 = scmp.eq.s32.totalorder %s12, 1
    %p72 = scmp.ne.s32.totalorder %s67, %s69
    %p73 = scmp.eq.s32.totalorder %s12, 0
    %p74 = por %p72, %p73
    %p75 = scmp.ne.s32.totalorder %s67, %s69
    %p76 = scmp.eq.s32.totalorder %s17, 1
    %p77 = por %p75, %p76
    %p78 = scmp.ne.s32.totalorder %s69, %s70
    %p79 = scmp.eq.s32.totalorder %s17, 0
    %p80 = por %p78, %p79
    %p81 = scmp.ne.s32.totalorder %s69, %s70
    %p82 = scmp.eq.s32.totalorder %s18, 1
    %p83 = por %p81, %p82
    %p85 = scmp.ne.s32.totalorder %s70, %s84
    %p86 = scmp.eq.s32.totalorder %s18, 0
    %p87 = por %p85, %p86
    %s89 = sadd.s32 %s88, 1
    %p92 = scmp.eq.s32.totalorder %s12, 1
    %p93 = scmp.ne.s32.totalorder %s88, %s90
    %p94 = scmp.eq.s32.totalorder %s12, 0
    %p95 = por %p93, %p94
    %p96 = scmp.ne.s32.totalorder %s88, %s90
    %p97 = scmp.eq.s32.totalorder %s17, 1
    %p98 = por %p96, %p97
    %p99 = scmp.ne.s32.totalorder %s90, %s91
    %p100 = scmp.eq.s32.totalorder %s17, 0
    %p101 = por %p99, %p100
    %p102 = scmp.ne.s32.totalorder %s90, %s91
    %p103 = scmp.eq.s32.totalorder %s18, 1
    %p104 = por %p102, %p103
    %p106 = scmp.ne.s32.totalorder %s91, %s105
    %p107 = scmp.eq.s32.totalorder %s18, 0
    %p108 = por %p106, %p107
    %s109 = ssub.s32 %s12, %s19
    %p110 = scmp.eq.s32.totalorder %s109, 0
    %s112 = sadd.s32 %s111, 1
    %s113 = scalar_select %p110, %s111, %s112
    %p116 = pneg %p110
    %p117 = scmp.eq.s32.totalorder %s12, 1
    %p118 = por %p116, %p117
    %p119 = scmp.ne.s32.totalorder %s111, %s114
    %p120 = scmp.eq.s32.totalorder %s12, 0
    %p121 = por %p119, %p120
    %p122 = scmp.ne.s32.totalorder %s111, %s114
    %p123 = scmp.eq.s32.totalorder %s17, 1
    %p124 = por %p122, %p123
    %p125 = scmp.ne.s32.totalorder %s114, %s115
    %p126 = scmp.eq.s32.totalorder %s17, 0
    %p127 = por %p125, %p126
    %p128 = scmp.ne.s32.totalorder %s114, %s115
    %p129 = scmp.eq.s32.totalorder %s18, 1
    %p130 = por %p128, %p129
    %p132 = scmp.ne.s32.totalorder %s115, %s131
    %p133 = scmp.eq.s32.totalorder %s18, 0
    %p134 = por %p132, %p133
    %s135 = ssub.s32 %s12, %s19
    %p136 = scmp.eq.s32.totalorder %s135, 0
    %s138 = sadd.s32 %s137, 1
    %s139 = scalar_select %p136, %s137, %s138
    %p142 = pneg %p136
    %p143 = scmp.eq.s32.totalorder %s12, 1
    %p144 = por %p142, %p143
    %p145 = scmp.ne.s32.totalorder %s137, %s140
    %p146 = scmp.eq.s32.totalorder %s12, 0
    %p147 = por %p145, %p146
    %p148 = scmp.ne.s32.totalorder %s137, %s140
    %p149 = scmp.eq.s32.totalorder %s17, 1
    %p150 = por %p148, %p149
    %p151 = scmp.ne.s32.totalorder %s140, %s141
    %p152 = scmp.eq.s32.totalorder %s17, 0
    %p153 = por %p151, %p152
    %p154 = scmp.ne.s32.totalorder %s140, %s141
    %p155 = scmp.eq.s32.totalorder %s18, 1
    %p156 = por %p154, %p155
    %p158 = scmp.ne.s32.totalorder %s141, %s157
    %p159 = scmp.eq.s32.totalorder %s18, 0
    %p160 = por %p158, %p159
    %p161 = scmp.le.s32.totalorder 1, %s12
    %p162 = scmp.lt.s32.totalorder %s12, 3
    %p163 = pnand %p161, %p162
    %p164 = pneg %p163
    // Predicated region
    $region9: #{encoder_block_mamba2.1} parent=5 // pred_check
      _
    $region10: #{encoder_block_mamba2.1} parent=5 // pred_check_branch
      %166 = sbr.rel (%p163) target = $region12
    $region11: #{encoder_block_mamba2.1} parent=5 // pred_region
      %s167 = ssub.s32 %s12, 1
      // Predicated region
      $region13: #{encoder_block_mamba2.1} parent=11 // pred_check
        %p168 = pneg %p59
      $region14: #{encoder_block_mamba2.1} parent=11 // pred_check_branch
        %170 = sbr.rel (%p168) target = $region16
      $region15: #{encoder_block_mamba2.1} parent=11 // pred_region
        _
      $region16: #{encoder_block_mamba2.1} parent=11 // pred_fallthru
        _
      // Predicated region
      $region17: #{encoder_block_mamba2.1} parent=11 // pred_check
        %p171 = pneg %p80
      $region18: #{encoder_block_mamba2.1} parent=11 // pred_check_branch
        %173 = sbr.rel (%p171) target = $region20
      $region19: #{encoder_block_mamba2.1} parent=11 // pred_region
        _
      $region20: #{encoder_block_mamba2.1} parent=11 // pred_fallthru
        _
      // Predicated region
      $region21: #{encoder_block_mamba2.1} parent=11 // pred_check
        %p174 = pneg %p101
      $region22: #{encoder_block_mamba2.1} parent=11 // pred_check_branch
        %176 = sbr.rel (%p174) target = $region24
      $region23: #{encoder_block_mamba2.1} parent=11 // pred_region
        _
      $region24: #{encoder_block_mamba2.1} parent=11 // pred_fallthru
        _
    $region12: #{encoder_block_mamba2.1} parent=5 // pred_fallthru
      _
    %p177 = scmp.lt.s32.totalorder %s12, 2
    // Predicated region
    $region25: #{encoder_block_mamba2.1} parent=5 // pred_check
      %p178 = pneg %p177
    $region26: #{encoder_block_mamba2.1} parent=5 // pred_check_branch
      %180 = sbr.rel (%p178) target = $region28
    $region27: #{encoder_block_mamba2.1} parent=5 // pred_region
      // Predicated region
      $region29: #{encoder_block_mamba2.1} parent=27 // pred_check
        %p181 = pneg %p32
      $region30: #{encoder_block_mamba2.1} parent=27 // pred_check_branch
        %183 = sbr.rel (%p181) target = $region32
      $region31: #{encoder_block_mamba2.1} parent=27 // pred_region
        %p184 = scmp.lt.s32.totalorder %s12, 1
        %s185 = scalar_select %p184, %s12, 1
        %s186 = smul.addr %s185, 16
        %s187 = smul.addr %s186, 8
        %s188 = scalar_lea.vmem %s0, %s187
      $region32: #{encoder_block_mamba2.1} parent=27 // pred_fallthru
        _
    $region28: #{encoder_block_mamba2.1} parent=5 // pred_fallthru
      _
    %p189 = scmp.le.s32.totalorder 1, %s12
    %p190 = scmp.lt.s32.totalorder %s12, 3
    %p191 = pnand %p189, %p190
    %p192 = pneg %p191
    // Predicated region
    $region33: #{encoder_block_mamba2.1} parent=5 // pred_check
      _
    $region34: #{encoder_block_mamba2.1} parent=5 // pred_check_branch
      %194 = sbr.rel (%p191) target = $region36
    $region35: #{encoder_block_mamba2.1} parent=5 // pred_region
      %s195 = ssub.s32 %s12, 1
      %p196 = scmp.lt.s32.totalorder %s17, 1
      %s197 = scalar_select %p196, %s17, 1
      %s198 = smul.addr %s197, 16
      %s199 = smul.addr %s198, 8
      %s200 = scalar_lea.vmem %s0, %s199
      %p201 = pneg %p38
      %p202 = pneg %p35
      %p203 = pneg %p59
      %p204 = pneg %p56
      %p205 = pneg %p80
      %p206 = pneg %p77
      %p207 = pneg %p101
      %p208 = pneg %p98
      %p209 = pneg %p127
      %p210 = pneg %p124
      %p211 = scmp.lt.s32.totalorder %s17, 1
      %s212 = scalar_select %p211, %s17, 1
      %s213 = smul.addr %s212, 16
      %s214 = smul.addr %s213, 8
      %s215 = scalar_lea.vmem %s4, %s214
      %p216 = pneg %p153
      %p217 = pneg %p150
      %p218 = scmp.lt.s32.totalorder %s17, 1
      %s219 = scalar_select %p218, %s17, 1
      %s220 = smul.addr %s219, 8
      %s221 = smul.addr %s220, 8
      %s222 = scalar_lea.vmem %s5, %s221
      %p223 = scmp.lt.s32.totalorder %s17, 1
      %s224 = scalar_select %p223, %s17, 1
      %s225 = smul.addr %s224, 16
      %s226 = smul.addr %s225, 8
      %s227 = scalar_lea.vmem %s0, %s226
      %p228 = scmp.lt.s32.totalorder %s17, 1
      %s229 = scalar_select %p228, %s17, 1
      %s230 = smul.addr %s229, 16
      %s231 = smul.addr %s230, 8
      %s232 = scalar_lea.vmem %s4, %s231
      %p233 = scmp.lt.s32.totalorder %s17, 1
      %s234 = scalar_select %p233, %s17, 1
      %s235 = smul.addr %s234, 8
      %s236 = smul.addr %s235, 8
      %s237 = scalar_lea.vmem %s5, %s236
      %v238 = vld [vmem:[%s227] sm:$0xff]
      %v239 = vld [vmem:[%s227 + $0x8] sm:$0xff]
      %v240 = vld [vmem:[%s227 + $0x10] sm:$0xff]
      %v241 = vld [vmem:[%s227 + $0x18] sm:$0xff]
      %v242 = vld [vmem:[%s227 + $0x20] sm:$0xff]
      %v243 = vld [vmem:[%s227 + $0x28] sm:$0xff]
      %v244 = vld [vmem:[%s227 + $0x30] sm:$0xff]
      %v245 = vld [vmem:[%s227 + $0x38] sm:$0xff]
      %v246 = vld [vmem:[%s227 + $0x40] sm:$0xff]
      %v247 = vld [vmem:[%s227 + $0x48] sm:$0xff]
      %v248 = vld [vmem:[%s227 + $0x50] sm:$0xff]
      %v249 = vld [vmem:[%s227 + $0x58] sm:$0xff]
      %v250 = vld [vmem:[%s227 + $0x60] sm:$0xff]
      %v251 = vld [vmem:[%s227 + $0x68] sm:$0xff]
      %v252 = vld [vmem:[%s227 + $0x70] sm:$0xff]
      %v253 = vld [vmem:[%s227 + $0x78] sm:$0xff]
      %v254 = vld [vmem:[%s1] sm:$0xff]
      %270 = vrot.lane.b32.xlu0 %v238, 124
      %v271 = vpop.permute.xlu0 %270
      %272 = vrot.lane.b32.xlu0 %v239, 124
      %v273 = vpop.permute.xlu0 %272
      %274 = vrot.lane.b32.xlu0 %v240, 124
      %v275 = vpop.permute.xlu0 %274
      %276 = vrot.lane.b32.xlu0 %v241, 124
      %v277 = vpop.permute.xlu0 %276
      %278 = vrot.lane.b32.xlu0 %v242, 124
      %v279 = vpop.permute.xlu0 %278
      %280 = vrot.lane.b32.xlu0 %v243, 124
      %v281 = vpop.permute.xlu0 %280
      %282 = vrot.lane.b32.xlu0 %v244, 124
      %v283 = vpop.permute.xlu0 %282
      %284 = vrot.lane.b32.xlu0 %v245, 124
      %v285 = vpop.permute.xlu0 %284
      %286 = vrot.lane.b32.xlu0 %v246, 124
      %v287 = vpop.permute.xlu0 %286
      %288 = vrot.lane.b32.xlu0 %v247, 124
      %v289 = vpop.permute.xlu0 %288
      %290 = vrot.lane.b32.xlu0 %v248, 124
      %v291 = vpop.permute.xlu0 %290
      %292 = vrot.lane.b32.xlu0 %v249, 124
      %v293 = vpop.permute.xlu0 %292
      %294 = vrot.lane.b32.xlu0 %v250, 124
      %v295 = vpop.permute.xlu0 %294
      %296 = vrot.lane.b32.xlu0 %v251, 124
      %v297 = vpop.permute.xlu0 %296
      %298 = vrot.lane.b32.xlu0 %v252, 124
      %v299 = vpop.permute.xlu0 %298
      %v316 = vrot.slane %v238, 7
      %v317 = vrot.slane %v239, 7
      %v318 = vrot.slane %v240, 7
      %v319 = vrot.slane %v241, 7
      %v320 = vrot.slane %v242, 7
      %v321 = vrot.slane %v243, 7
      %v322 = vrot.slane %v244, 7
      %v323 = vrot.slane %v245, 7
      %v324 = vrot.slane %v246, 7
      %v325 = vrot.slane %v247, 7
      %v326 = vrot.slane %v248, 7
      %v327 = vrot.slane %v249, 7
      %v328 = vrot.slane %v250, 7
      %v329 = vrot.slane %v251, 7
      %v330 = vrot.slane %v252, 7
      %v331 = vrot.slane %v253, 7
      %332 = vrot.lane.b32.xlu0 %v316, 124
      %v333 = vpop.permute.xlu0 %332
      %334 = vrot.lane.b32.xlu0 %v317, 124
      %v335 = vpop.permute.xlu0 %334
      %336 = vrot.lane.b32.xlu0 %v318, 124
      %v337 = vpop.permute.xlu0 %336
      %338 = vrot.lane.b32.xlu0 %v319, 124
      %v339 = vpop.permute.xlu0 %338
      %340 = vrot.lane.b32.xlu0 %v320, 124
      %v341 = vpop.permute.xlu0 %340
      %342 = vrot.lane.b32.xlu0 %v321, 124
      %v343 = vpop.permute.xlu0 %342
      %344 = vrot.lane.b32.xlu0 %v322, 124
      %v345 = vpop.permute.xlu0 %344
      %346 = vrot.lane.b32.xlu0 %v323, 124
      %v347 = vpop.permute.xlu0 %346
      %348 = vrot.lane.b32.xlu0 %v324, 124
      %v349 = vpop.permute.xlu0 %348
      %350 = vrot.lane.b32.xlu0 %v325, 124
      %v351 = vpop.permute.xlu0 %350
      %352 = vrot.lane.b32.xlu0 %v326, 124
      %v353 = vpop.permute.xlu0 %352
      %354 = vrot.lane.b32.xlu0 %v327, 124
      %v355 = vpop.permute.xlu0 %354
      %356 = vrot.lane.b32.xlu0 %v328, 124
      %v357 = vpop.permute.xlu0 %356
      %358 = vrot.lane.b32.xlu0 %v329, 124
      %v359 = vpop.permute.xlu0 %358
      %360 = vrot.lane.b32.xlu0 %v330, 124
      %v361 = vpop.permute.xlu0 %360
      %362 = vrot.lane.b32.xlu0 %v331, 124
      %v363 = vpop.permute.xlu0 %362
      %vm380 = vcmask 1040384
      %v381 = vsel %vm380, 0.0, %v333
      %v382 = vsel %vm380, 0.0, %v335
      %v383 = vsel %vm380, 0.0, %v337
      %v384 = vsel %vm380, 0.0, %v339
      %v385 = vsel %vm380, 0.0, %v341
      %v386 = vsel %vm380, 0.0, %v343
      %v387 = vsel %vm380, 0.0, %v345
      %v388 = vsel %vm380, 0.0, %v347
      %v389 = vsel %vm380, 0.0, %v349
      %v390 = vsel %vm380, 0.0, %v351
      %v391 = vsel %vm380, 0.0, %v353
      %v392 = vsel %vm380, 0.0, %v355
      %v393 = vsel %vm380, 0.0, %v357
      %v394 = vsel %vm380, 0.0, %v359
      %v395 = vsel %vm380, 0.0, %v361
      %v396 = vsel %vm380, 0.0, %v363
      %v397 = vrot.slane %v238, 1
      %v398 = vrot.slane %v239, 1
      %v399 = vrot.slane %v240, 1
      %v400 = vrot.slane %v241, 1
      %v401 = vrot.slane %v242, 1
      %v402 = vrot.slane %v243, 1
      %v403 = vrot.slane %v244, 1
      %v404 = vrot.slane %v245, 1
      %v405 = vrot.slane %v246, 1
      %v406 = vrot.slane %v247, 1
      %v407 = vrot.slane %v248, 1
      %v408 = vrot.slane %v249, 1
      %v409 = vrot.slane %v250, 1
      %v410 = vrot.slane %v251, 1
      %v411 = vrot.slane %v252, 1
      %v412 = vrot.slane %v253, 1
      %vm429 = vcmask 1046528
      %v430 = vsel %vm429, %v397, 0.0
      %v431 = vsel %vm429, %v398, 0.0
      %v432 = vsel %vm429, %v399, 0.0
      %v433 = vsel %vm429, %v400, 0.0
      %v434 = vsel %vm429, %v401, 0.0
      %v435 = vsel %vm429, %v402, 0.0
      %v436 = vsel %vm429, %v403, 0.0
      %v437 = vsel %vm429, %v404, 0.0
      %v438 = vsel %vm429, %v405, 0.0
      %v439 = vsel %vm429, %v406, 0.0
      %v440 = vsel %vm429, %v407, 0.0
      %v441 = vsel %vm429, %v408, 0.0
      %v442 = vsel %vm429, %v409, 0.0
      %v443 = vsel %vm429, %v410, 0.0
      %v444 = vsel %vm429, %v411, 0.0
      %v445 = vsel %vm429, %v412, 0.0
      %v446 = vlaneseq
      %v447 = vshrl.u32 %v446, 7
      %v448 = vsub.s32 4, %v447
      %v449 = vrot.slane %v254, %v448
      %v450 = vmul.f32 %v449, %v238
      %v451 = vmul.f32 %v449, %v239
      %v452 = vmul.f32 %v449, %v240
      %v453 = vmul.f32 %v449, %v241
      %v454 = vmul.f32 %v449, %v242
      %v455 = vmul.f32 %v449, %v243
      %v456 = vmul.f32 %v449, %v244
      %v457 = vmul.f32 %v449, %v245
      %v458 = vmul.f32 %v449, %v246
      %v459 = vmul.f32 %v449, %v247
      %v460 = vmul.f32 %v449, %v248
      %v461 = vmul.f32 %v449, %v249
      %v462 = vmul.f32 %v449, %v250
      %v463 = vmul.f32 %v449, %v251
      %v464 = vmul.f32 %v449, %v252
      %v465 = vmul.f32 %v449, %v253
      %v466 = vlaneseq
      %v467 = vshrl.u32 %v466, 7
      %v468 = vsub.s32 0, %v467
      %v469 = vrot.slane %v254, %v468
      %v470 = vmul.f32 %v469, 0.0
      %v471 = vmul.f32 %v469, %v238
      %v472 = vmul.f32 %v469, %v239
      %v473 = vmul.f32 %v469, %v240
      %v474 = vmul.f32 %v469, %v241
      %v475 = vmul.f32 %v469, %v242
      %v476 = vmul.f32 %v469, %v243
      %v477 = vmul.f32 %v469, %v244
      %v478 = vmul.f32 %v469, %v245
      %v479 = vmul.f32 %v469, %v246
      %v480 = vmul.f32 %v469, %v247
      %v481 = vmul.f32 %v469, %v248
      %v482 = vmul.f32 %v469, %v249
      %v483 = vmul.f32 %v469, %v250
      %v484 = vmul.f32 %v469, %v251
      %v485 = vmul.f32 %v469, %v252
      %v486 = vadd.f32 %v450, %v470
      %v487 = vadd.f32 %v451, %v471
      %v488 = vadd.f32 %v452, %v472
      %v489 = vadd.f32 %v453, %v473
      %v490 = vadd.f32 %v454, %v474
      %v491 = vadd.f32 %v455, %v475
      %v492 = vadd.f32 %v456, %v476
      %v493 = vadd.f32 %v457, %v477
      %v494 = vadd.f32 %v458, %v478
      %v495 = vadd.f32 %v459, %v479
      %v496 = vadd.f32 %v460, %v480
      %v497 = vadd.f32 %v461, %v481
      %v498 = vadd.f32 %v462, %v482
      %v499 = vadd.f32 %v463, %v483
      %v500 = vadd.f32 %v464, %v484
      %v501 = vadd.f32 %v465, %v485
      %v502 = vlaneseq
      %v503 = vshrl.u32 %v502, 7
      %v504 = vsub.s32 1, %v503
      %v505 = vrot.slane %v254, %v504
      %v506 = vmul.f32 %v505, %v239
      %v507 = vmul.f32 %v505, %v240
      %v508 = vmul.f32 %v505, %v241
      %v509 = vmul.f32 %v505, %v242
      %v510 = vmul.f32 %v505, %v243
      %v511 = vmul.f32 %v505, %v244
      %v512 = vmul.f32 %v505, %v245
      %v513 = vmul.f32 %v505, %v246
      %v514 = vmul.f32 %v505, %v247
      %v515 = vmul.f32 %v505, %v248
      %v516 = vmul.f32 %v505, %v249
      %v517 = vmul.f32 %v505, %v250
      %v518 = vmul.f32 %v505, %v251
      %v519 = vmul.f32 %v505, %v252
      %v520 = vmul.f32 %v505, %v253
      %v521 = vmul.f32 %v505, 0.0
      %v522 = vadd.f32 %v486, %v506
      %v523 = vadd.f32 %v487, %v507
      %v524 = vadd.f32 %v488, %v508
      %v525 = vadd.f32 %v489, %v509
      %v526 = vadd.f32 %v490, %v510
      %v527 = vadd.f32 %v491, %v511
      %v528 = vadd.f32 %v492, %v512
      %v529 = vadd.f32 %v493, %v513
      %v530 = vadd.f32 %v494, %v514
      %v531 = vadd.f32 %v495, %v515
      %v532 = vadd.f32 %v496, %v516
      %v533 = vadd.f32 %v497, %v517
      %v534 = vadd.f32 %v498, %v518
      %v535 = vadd.f32 %v499, %v519
      %v536 = vadd.f32 %v500, %v520
      %v537 = vadd.f32 %v501, %v521
      %v538 = vlaneseq
      %v539 = vshrl.u32 %v538, 7
      %v540 = vsub.s32 2, %v539
      %v541 = vrot.slane %v254, %v540
      %v542 = vmul.f32 %v541, %v381
      %v543 = vmul.f32 %v541, %v382
      %v544 = vmul.f32 %v541, %v383
      %v545 = vmul.f32 %v541, %v384
      %v546 = vmul.f32 %v541, %v385
      %v547 = vmul.f32 %v541, %v386
      %v548 = vmul.f32 %v541, %v387
      %v549 = vmul.f32 %v541, %v388
      %v550 = vmul.f32 %v541, %v389
      %v551 = vmul.f32 %v541, %v390
      %v552 = vmul.f32 %v541, %v391
      %v553 = vmul.f32 %v541, %v392
      %v554 = vmul.f32 %v541, %v393
      %v555 = vmul.f32 %v541, %v394
      %v556 = vmul.f32 %v541, %v395
      %v557 = vmul.f32 %v541, %v396
      %v558 = vadd.f32 %v522, %v542
      %v559 = vadd.f32 %v523, %v543
      %v560 = vadd.f32 %v524, %v544
      %v561 = vadd.f32 %v525, %v545
      %v562 = vadd.f32 %v526, %v546
      %v563 = vadd.f32 %v527, %v547
      %v564 = vadd.f32 %v528, %v548
      %v565 = vadd.f32 %v529, %v549
      %v566 = vadd.f32 %v530, %v550
      %v567 = vadd.f32 %v531, %v551
      %v568 = vadd.f32 %v532, %v552
      %v569 = vadd.f32 %v533, %v553
      %v570 = vadd.f32 %v534, %v554
      %v571 = vadd.f32 %v535, %v555
      %v572 = vadd.f32 %v536, %v556
      %v573 = vadd.f32 %v537, %v557
      %v574 = vlaneseq
      %v575 = vshrl.u32 %v574, 7
      %v576 = vsub.s32 3, %v575
      %v577 = vrot.slane %v254, %v576
      %578 = vrot.lane.b32.xlu0 %v253, 124
      %v579 = vpop.permute.xlu0 %578
      %v581 = vmul.f32 %v577, %v271
      %v582 = vmul.f32 %v577, %v273
      %v583 = vmul.f32 %v577, %v275
      %v584 = vmul.f32 %v577, %v277
      %v585 = vmul.f32 %v577, %v279
      %v586 = vmul.f32 %v577, %v281
      %v587 = vmul.f32 %v577, %v283
      %v588 = vmul.f32 %v577, %v285
      %v589 = vmul.f32 %v577, %v287
      %v590 = vmul.f32 %v577, %v289
      %v591 = vmul.f32 %v577, %v291
      %v592 = vmul.f32 %v577, %v293
      %v593 = vmul.f32 %v577, %v295
      %v594 = vmul.f32 %v577, %v297
      %v595 = vmul.f32 %v577, %v299
      %v596 = vmul.f32 %v577, %v579
      %v597 = vadd.f32 %v558, %v581
      %v598 = vadd.f32 %v559, %v582
      %v599 = vadd.f32 %v560, %v583
      %v600 = vadd.f32 %v561, %v584
      %v601 = vadd.f32 %v562, %v585
      %v602 = vadd.f32 %v563, %v586
      %v603 = vadd.f32 %v564, %v587
      %v604 = vadd.f32 %v565, %v588
      %v605 = vadd.f32 %v566, %v589
      %v606 = vadd.f32 %v567, %v590
      %v607 = vadd.f32 %v568, %v591
      %v608 = vadd.f32 %v569, %v592
      %v609 = vadd.f32 %v570, %v593
      %v610 = vadd.f32 %v571, %v594
      %v611 = vadd.f32 %v572, %v595
      %v612 = vadd.f32 %v573, %v596
      %v613 = vlaneseq
      %v614 = vshrl.u32 %v613, 7
      %v615 = vsub.s32 5, %v614
      %v616 = vrot.slane %v254, %v615
      %v617 = vadd.f32 %v597, %v616
      %v618 = vadd.f32 %v598, %v616
      %v619 = vadd.f32 %v599, %v616
      %v620 = vadd.f32 %v600, %v616
      %v621 = vadd.f32 %v601, %v616
      %v622 = vadd.f32 %v602, %v616
      %v623 = vadd.f32 %v603, %v616
      %v624 = vadd.f32 %v604, %v616
      %v625 = vadd.f32 %v605, %v616
      %v626 = vadd.f32 %v606, %v616
      %v627 = vadd.f32 %v607, %v616
      %v628 = vadd.f32 %v608, %v616
      %v629 = vadd.f32 %v609, %v616
      %v630 = vadd.f32 %v610, %v616
      %v631 = vadd.f32 %v611, %v616
      %v632 = vadd.f32 %v612, %v616
      %v633 = vmul.f32 %v449, %v271
      %v634 = vmul.f32 %v449, %v273
      %v635 = vmul.f32 %v449, %v275
      %v636 = vmul.f32 %v449, %v277
      %v637 = vmul.f32 %v449, %v279
      %v638 = vmul.f32 %v449, %v281
      %v639 = vmul.f32 %v449, %v283
      %v640 = vmul.f32 %v449, %v285
      %v641 = vmul.f32 %v449, %v287
      %v642 = vmul.f32 %v449, %v289
      %v643 = vmul.f32 %v449, %v291
      %v644 = vmul.f32 %v449, %v293
      %v645 = vmul.f32 %v449, %v295
      %v646 = vmul.f32 %v449, %v297
      %v647 = vmul.f32 %v449, %v299
      %v648 = vmul.f32 %v449, %v579
      %v649 = vmul.f32 %v469, %v271
      %v650 = vmul.f32 %v469, %v273
      %v651 = vmul.f32 %v469, %v275
      %v652 = vmul.f32 %v469, %v277
      %v653 = vmul.f32 %v469, %v279
      %v654 = vmul.f32 %v469, %v281
      %v655 = vmul.f32 %v469, %v283
      %v656 = vmul.f32 %v469, %v285
      %v657 = vmul.f32 %v469, %v287
      %v658 = vmul.f32 %v469, %v289
      %v659 = vmul.f32 %v469, %v291
      %v660 = vmul.f32 %v469, %v293
      %v661 = vmul.f32 %v469, %v295
      %v662 = vmul.f32 %v469, %v297
      %v663 = vmul.f32 %v469, %v299
      %v664 = vadd.f32 %v633, %v470
      %v665 = vadd.f32 %v634, %v649
      %v666 = vadd.f32 %v635, %v650
      %v667 = vadd.f32 %v636, %v651
      %v668 = vadd.f32 %v637, %v652
      %v669 = vadd.f32 %v638, %v653
      %v670 = vadd.f32 %v639, %v654
      %v671 = vadd.f32 %v640, %v655
      %v672 = vadd.f32 %v641, %v656
      %v673 = vadd.f32 %v642, %v657
      %v674 = vadd.f32 %v643, %v658
      %v675 = vadd.f32 %v644, %v659
      %v676 = vadd.f32 %v645, %v660
      %v677 = vadd.f32 %v646, %v661
      %v678 = vadd.f32 %v647, %v662
      %v679 = vadd.f32 %v648, %v663
      %681 = vrot.lane.b32.xlu0 0.0, 124
      %v682 = vpop.permute.xlu0 %681
      %v684 = vmul.f32 %v505, %v273
      %v685 = vmul.f32 %v505, %v275
      %v686 = vmul.f32 %v505, %v277
      %v687 = vmul.f32 %v505, %v279
      %v688 = vmul.f32 %v505, %v281
      %v689 = vmul.f32 %v505, %v283
      %v690 = vmul.f32 %v505, %v285
      %v691 = vmul.f32 %v505, %v287
      %v692 = vmul.f32 %v505, %v289
      %v693 = vmul.f32 %v505, %v291
      %v694 = vmul.f32 %v505, %v293
      %v695 = vmul.f32 %v505, %v295
      %v696 = vmul.f32 %v505, %v297
      %v697 = vmul.f32 %v505, %v299
      %v698 = vmul.f32 %v505, %v579
      %v699 = vmul.f32 %v505, %v682
      %v700 = vadd.f32 %v664, %v684
      %v701 = vadd.f32 %v665, %v685
      %v702 = vadd.f32 %v666, %v686
      %v703 = vadd.f32 %v667, %v687
      %v704 = vadd.f32 %v668, %v688
      %v705 = vadd.f32 %v669, %v689
      %v706 = vadd.f32 %v670, %v690
      %v707 = vadd.f32 %v671, %v691
      %v708 = vadd.f32 %v672, %v692
      %v709 = vadd.f32 %v673, %v693
      %v710 = vadd.f32 %v674, %v694
      %v711 = vadd.f32 %v675, %v695
      %v712 = vadd.f32 %v676, %v696
      %v713 = vadd.f32 %v677, %v697
      %v714 = vadd.f32 %v678, %v698
      %v715 = vadd.f32 %v679, %v699
      %v716 = vmul.f32 %v541, %v238
      %v717 = vmul.f32 %v541, %v239
      %v718 = vmul.f32 %v541, %v240
      %v719 = vmul.f32 %v541, %v241
      %v720 = vmul.f32 %v541, %v242
      %v721 = vmul.f32 %v541, %v243
      %v722 = vmul.f32 %v541, %v244
      %v723 = vmul.f32 %v541, %v245
      %v724 = vmul.f32 %v541, %v246
      %v725 = vmul.f32 %v541, %v247
      %v726 = vmul.f32 %v541, %v248
      %v727 = vmul.f32 %v541, %v249
      %v728 = vmul.f32 %v541, %v250
      %v729 = vmul.f32 %v541, %v251
      %v730 = vmul.f32 %v541, %v252
      %v731 = vmul.f32 %v541, %v253
      %v732 = vadd.f32 %v700, %v716
      %v733 = vadd.f32 %v701, %v717
      %v734 = vadd.f32 %v702, %v718
      %v735 = vadd.f32 %v703, %v719
      %v736 = vadd.f32 %v704, %v720
      %v737 = vadd.f32 %v705, %v721
      %v738 = vadd.f32 %v706, %v722
      %v739 = vadd.f32 %v707, %v723
      %v740 = vadd.f32 %v708, %v724
      %v741 = vadd.f32 %v709, %v725
      %v742 = vadd.f32 %v710, %v726
      %v743 = vadd.f32 %v711, %v727
      %v744 = vadd.f32 %v712, %v728
      %v745 = vadd.f32 %v713, %v729
      %v746 = vadd.f32 %v714, %v730
      %v747 = vadd.f32 %v715, %v731
      %v748 = vmul.f32 %v577, %v430
      %v749 = vmul.f32 %v577, %v431
      %v750 = vmul.f32 %v577, %v432
      %v751 = vmul.f32 %v577, %v433
      %v752 = vmul.f32 %v577, %v434
      %v753 = vmul.f32 %v577, %v435
      %v754 = vmul.f32 %v577, %v436
      %v755 = vmul.f32 %v577, %v437
      %v756 = vmul.f32 %v577, %v438
      %v757 = vmul.f32 %v577, %v439
      %v758 = vmul.f32 %v577, %v440
      %v759 = vmul.f32 %v577, %v441
      %v760 = vmul.f32 %v577, %v442
      %v761 = vmul.f32 %v577, %v443
      %v762 = vmul.f32 %v577, %v444
      %v763 = vmul.f32 %v577, %v445
      %v764 = vadd.f32 %v732, %v748
      %v765 = vadd.f32 %v733, %v749
      %v766 = vadd.f32 %v734, %v750
      %v767 = vadd.f32 %v735, %v751
      %v768 = vadd.f32 %v736, %v752
      %v769 = vadd.f32 %v737, %v753
      %v770 = vadd.f32 %v738, %v754
      %v771 = vadd.f32 %v739, %v755
      %v772 = vadd.f32 %v740, %v756
      %v773 = vadd.f32 %v741, %v757
      %v774 = vadd.f32 %v742, %v758
      %v775 = vadd.f32 %v743, %v759
      %v776 = vadd.f32 %v744, %v760
      %v777 = vadd.f32 %v745, %v761
      %v778 = vadd.f32 %v746, %v762
      %v779 = vadd.f32 %v747, %v763
      %v780 = vadd.f32 %v764, %v616
      %v781 = vadd.f32 %v765, %v616
      %v782 = vadd.f32 %v766, %v616
      %v783 = vadd.f32 %v767, %v616
      %v784 = vadd.f32 %v768, %v616
      %v785 = vadd.f32 %v769, %v616
      %v786 = vadd.f32 %v770, %v616
      %v787 = vadd.f32 %v771, %v616
      %v788 = vadd.f32 %v772, %v616
      %v789 = vadd.f32 %v773, %v616
      %v790 = vadd.f32 %v774, %v616
      %v791 = vadd.f32 %v775, %v616
      %v792 = vadd.f32 %v776, %v616
      %v793 = vadd.f32 %v777, %v616
      %v794 = vadd.f32 %v778, %v616
      %v795 = vadd.f32 %v779, %v616
      %812 = vrot.lane.b32.xlu0 %v780, 4
      %v813 = vpop.permute.xlu0 %812
      %814 = vrot.lane.b32.xlu0 %v781, 4
      %v815 = vpop.permute.xlu0 %814
      %816 = vrot.lane.b32.xlu0 %v782, 4
      %v817 = vpop.permute.xlu0 %816
      %818 = vrot.lane.b32.xlu0 %v783, 4
      %v819 = vpop.permute.xlu0 %818
      %820 = vrot.lane.b32.xlu0 %v784, 4
      %v821 = vpop.permute.xlu0 %820
      %822 = vrot.lane.b32.xlu0 %v785, 4
      %v823 = vpop.permute.xlu0 %822
      %824 = vrot.lane.b32.xlu0 %v786, 4
      %v825 = vpop.permute.xlu0 %824
      %826 = vrot.lane.b32.xlu0 %v787, 4
      %v827 = vpop.permute.xlu0 %826
      %828 = vrot.lane.b32.xlu0 %v788, 4
      %v829 = vpop.permute.xlu0 %828
      %830 = vrot.lane.b32.xlu0 %v789, 4
      %v831 = vpop.permute.xlu0 %830
      %832 = vrot.lane.b32.xlu0 %v790, 4
      %v833 = vpop.permute.xlu0 %832
      %834 = vrot.lane.b32.xlu0 %v791, 4
      %v835 = vpop.permute.xlu0 %834
      %836 = vrot.lane.b32.xlu0 %v792, 4
      %v837 = vpop.permute.xlu0 %836
      %838 = vrot.lane.b32.xlu0 %v793, 4
      %v839 = vpop.permute.xlu0 %838
      %840 = vrot.lane.b32.xlu0 %v794, 4
      %v841 = vpop.permute.xlu0 %840
      %842 = vrot.lane.b32.xlu0 %v795, 4
      %v843 = vpop.permute.xlu0 %842
      %vm860 = vcmask 31744
      %v861 = vsel %vm860, %v617, %v813
      %v862 = vsel %vm860, %v618, %v815
      %v863 = vsel %vm860, %v619, %v817
      %v864 = vsel %vm860, %v620, %v819
      %v865 = vsel %vm860, %v621, %v821
      %v866 = vsel %vm860, %v622, %v823
      %v867 = vsel %vm860, %v623, %v825
      %v868 = vsel %vm860, %v624, %v827
      %v869 = vsel %vm860, %v625, %v829
      %v870 = vsel %vm860, %v626, %v831
      %v871 = vsel %vm860, %v627, %v833
      %v872 = vsel %vm860, %v628, %v835
      %v873 = vsel %vm860, %v629, %v837
      %v874 = vsel %vm860, %v630, %v839
      %v875 = vsel %vm860, %v631, %v841
      %v876 = vsel %vm860, %v632, %v843
      %vm877 = vcmask 64512
      %878 = vst.msk [vmem:[%s232] sm:$0xff] %vm877, %v861
      %879 = vst.msk [vmem:[%s232 + $0x8] sm:$0xff] %vm877, %v862
      %880 = vst.msk [vmem:[%s232 + $0x10] sm:$0xff] %vm877, %v863
      %881 = vst.msk [vmem:[%s232 + $0x18] sm:$0xff] %vm877, %v864
      %882 = vst.msk [vmem:[%s232 + $0x20] sm:$0xff] %vm877, %v865
      %883 = vst.msk [vmem:[%s232 + $0x28] sm:$0xff] %vm877, %v866
      %884 = vst.msk [vmem:[%s232 + $0x30] sm:$0xff] %vm877, %v867
      %885 = vst.msk [vmem:[%s232 + $0x38] sm:$0xff] %vm877, %v868
      %886 = vst.msk [vmem:[%s232 + $0x40] sm:$0xff] %vm877, %v869
      %887 = vst.msk [vmem:[%s232 + $0x48] sm:$0xff] %vm877, %v870
      %888 = vst.msk [vmem:[%s232 + $0x50] sm:$0xff] %vm877, %v871
      %889 = vst.msk [vmem:[%s232 + $0x58] sm:$0xff] %vm877, %v872
      %890 = vst.msk [vmem:[%s232 + $0x60] sm:$0xff] %vm877, %v873
      %891 = vst.msk [vmem:[%s232 + $0x68] sm:$0xff] %vm877, %v874
      %892 = vst.msk [vmem:[%s232 + $0x70] sm:$0xff] %vm877, %v875
      %893 = vst.msk [vmem:[%s232 + $0x78] sm:$0xff] %vm877, %v876
      %v894 = vld [vmem:[%s2] sm:$0xf]
      %v895 = vld [vmem:[%s3] sm:$0x1]
      %v897 = vlaneseq
      %v898 = vshrl.u32 %v897, 7
      %v899 = vsub.s32 0, %v898
      %v900 = vrot.slane %v895, %v899
      %903 = vset.pattern.permute.xlu0 0
      %904 = vperm.xlu0 %903, %v617
      %v905 = vpop.permute.xlu0 %904
      %908 = vset.pattern.permute.xlu0 0
      %909 = vperm.xlu0 %908, %v618
      %v910 = vpop.permute.xlu0 %909
      %913 = vset.pattern.permute.xlu0 0
      %914 = vperm.xlu0 %913, %v619
      %v915 = vpop.permute.xlu0 %914
      %918 = vset.pattern.permute.xlu0 0
      %919 = vperm.xlu0 %918, %v620
      %v920 = vpop.permute.xlu0 %919
      %923 = vset.pattern.permute.xlu0 0
      %924 = vperm.xlu0 %923, %v621
      %v925 = vpop.permute.xlu0 %924
      %928 = vset.pattern.permute.xlu0 0
      %929 = vperm.xlu0 %928, %v622
      %v930 = vpop.permute.xlu0 %929
      %933 = vset.pattern.permute.xlu0 0
      %934 = vperm.xlu0 %933, %v623
      %v935 = vpop.permute.xlu0 %934
      %938 = vset.pattern.permute.xlu0 0
      %939 = vperm.xlu0 %938, %v624
      %v940 = vpop.permute.xlu0 %939
      %943 = vset.pattern.permute.xlu0 0
      %944 = vperm.xlu0 %943, %v625
      %v945 = vpop.permute.xlu0 %944
      %948 = vset.pattern.permute.xlu0 0
      %949 = vperm.xlu0 %948, %v626
      %v950 = vpop.permute.xlu0 %949
      %953 = vset.pattern.permute.xlu0 0
      %954 = vperm.xlu0 %953, %v627
      %v955 = vpop.permute.xlu0 %954
      %958 = vset.pattern.permute.xlu0 0
      %959 = vperm.xlu0 %958, %v628
      %v960 = vpop.permute.xlu0 %959
      %963 = vset.pattern.permute.xlu0 0
      %964 = vperm.xlu0 %963, %v629
      %v965 = vpop.permute.xlu0 %964
      %968 = vset.pattern.permute.xlu0 0
      %969 = vperm.xlu0 %968, %v630
      %v970 = vpop.permute.xlu0 %969
      %973 = vset.pattern.permute.xlu0 0
      %974 = vperm.xlu0 %973, %v631
      %v975 = vpop.permute.xlu0 %974
      %978 = vset.pattern.permute.xlu0 0
      %979 = vperm.xlu0 %978, %v632
      %v980 = vpop.permute.xlu0 %979
      %v982 = vlaneseq
      %v983 = vshrl.u32 %v982, 7
      %v984 = vsub.s32 0, %v983
      %v985 = vrot.slane %v894, %v984
      %v986 = vmul.f32 %v905, %v985
      %v987 = vmul.f32 %v910, %v985
      %v988 = vmul.f32 %v915, %v985
      %v989 = vmul.f32 %v920, %v985
      %v990 = vmul.f32 %v925, %v985
      %v991 = vmul.f32 %v930, %v985
      %v992 = vmul.f32 %v935, %v985
      %v993 = vmul.f32 %v940, %v985
      %v994 = vmul.f32 %v945, %v985
      %v995 = vmul.f32 %v950, %v985
      %v996 = vmul.f32 %v955, %v985
      %v997 = vmul.f32 %v960, %v985
      %v998 = vmul.f32 %v965, %v985
      %v999 = vmul.f32 %v970, %v985
      %v1000 = vmul.f32 %v975, %v985
      %v1001 = vmul.f32 %v980, %v985
      %v1002 = vadd.f32 %v900, %v986
      %v1003 = vadd.f32 %v900, %v987
      %v1004 = vadd.f32 %v900, %v988
      %v1005 = vadd.f32 %v900, %v989
      %v1006 = vadd.f32 %v900, %v990
      %v1007 = vadd.f32 %v900, %v991
      %v1008 = vadd.f32 %v900, %v992
      %v1009 = vadd.f32 %v900, %v993
      %v1010 = vadd.f32 %v900, %v994
      %v1011 = vadd.f32 %v900, %v995
      %v1012 = vadd.f32 %v900, %v996
      %v1013 = vadd.f32 %v900, %v997
      %v1014 = vadd.f32 %v900, %v998
      %v1015 = vadd.f32 %v900, %v999
      %v1016 = vadd.f32 %v900, %v1000
      %v1017 = vadd.f32 %v900, %v1001
      %1018 = vset.pattern.permute.xlu0 0
      %1019 = vperm.xlu0 %1018, %v780
      %v1020 = vpop.permute.xlu0 %1019
      %1022 = vset.pattern.permute.xlu0 0
      %1023 = vperm.xlu0 %1022, %v781
      %v1024 = vpop.permute.xlu0 %1023
      %1026 = vset.pattern.permute.xlu0 0
      %1027 = vperm.xlu0 %1026, %v782
      %v1028 = vpop.permute.xlu0 %1027
      %1030 = vset.pattern.permute.xlu0 0
      %1031 = vperm.xlu0 %1030, %v783
      %v1032 = vpop.permute.xlu0 %1031
      %1034 = vset.pattern.permute.xlu0 0
      %1035 = vperm.xlu0 %1034, %v784
      %v1036 = vpop.permute.xlu0 %1035
      %1038 = vset.pattern.permute.xlu0 0
      %1039 = vperm.xlu0 %1038, %v785
      %v1040 = vpop.permute.xlu0 %1039
      %1042 = vset.pattern.permute.xlu0 0
      %1043 = vperm.xlu0 %1042, %v786
      %v1044 = vpop.permute.xlu0 %1043
      %1046 = vset.pattern.permute.xlu0 0
      %1047 = vperm.xlu0 %1046, %v787
      %v1048 = vpop.permute.xlu0 %1047
      %1050 = vset.pattern.permute.xlu0 0
      %1051 = vperm.xlu0 %1050, %v788
      %v1052 = vpop.permute.xlu0 %1051
      %1054 = vset.pattern.permute.xlu0 0
      %1055 = vperm.xlu0 %1054, %v789
      %v1056 = vpop.permute.xlu0 %1055
      %1058 = vset.pattern.permute.xlu0 0
      %1059 = vperm.xlu0 %1058, %v790
      %v1060 = vpop.permute.xlu0 %1059
      %1062 = vset.pattern.permute.xlu0 0
      %1063 = vperm.xlu0 %1062, %v791
      %v1064 = vpop.permute.xlu0 %1063
      %1066 = vset.pattern.permute.xlu0 0
      %1067 = vperm.xlu0 %1066, %v792
      %v1068 = vpop.permute.xlu0 %1067
      %1070 = vset.pattern.permute.xlu0 0
      %1071 = vperm.xlu0 %1070, %v793
      %v1072 = vpop.permute.xlu0 %1071
      %1074 = vset.pattern.permute.xlu0 0
      %1075 = vperm.xlu0 %1074, %v794
      %v1076 = vpop.permute.xlu0 %1075
      %1078 = vset.pattern.permute.xlu0 0
      %1079 = vperm.xlu0 %1078, %v795
      %v1080 = vpop.permute.xlu0 %1079
      %v1082 = vmul.f32 %v1020, %v985
      %v1083 = vmul.f32 %v1024, %v985
      %v1084 = vmul.f32 %v1028, %v985
      %v1085 = vmul.f32 %v1032, %v985
      %v1086 = vmul.f32 %v1036, %v985
      %v1087 = vmul.f32 %v1040, %v985
      %v1088 = vmul.f32 %v1044, %v985
      %v1089 = vmul.f32 %v1048, %v985
      %v1090 = vmul.f32 %v1052, %v985
      %v1091 = vmul.f32 %v1056, %v985
      %v1092 = vmul.f32 %v1060, %v985
      %v1093 = vmul.f32 %v1064, %v985
      %v1094 = vmul.f32 %v1068, %v985
      %v1095 = vmul.f32 %v1072, %v985
      %v1096 = vmul.f32 %v1076, %v985
      %v1097 = vmul.f32 %v1080, %v985
      %v1098 = vadd.f32 %v900, %v1082
      %v1099 = vadd.f32 %v900, %v1083
      %v1100 = vadd.f32 %v900, %v1084
      %v1101 = vadd.f32 %v900, %v1085
      %v1102 = vadd.f32 %v900, %v1086
      %v1103 = vadd.f32 %v900, %v1087
      %v1104 = vadd.f32 %v900, %v1088
      %v1105 = vadd.f32 %v900, %v1089
      %v1106 = vadd.f32 %v900, %v1090
      %v1107 = vadd.f32 %v900, %v1091
      %v1108 = vadd.f32 %v900, %v1092
      %v1109 = vadd.f32 %v900, %v1093
      %v1110 = vadd.f32 %v900, %v1094
      %v1111 = vadd.f32 %v900, %v1095
      %v1112 = vadd.f32 %v900, %v1096
      %v1113 = vadd.f32 %v900, %v1097
      %1114 = vset.pattern.permute.xlu0 1
      %1115 = vperm.xlu0 %1114, %v617
      %v1116 = vpop.permute.xlu0 %1115
      %1118 = vset.pattern.permute.xlu0 1
      %1119 = vperm.xlu0 %1118, %v618
      %v1120 = vpop.permute.xlu0 %1119
      %1122 = vset.pattern.permute.xlu0 1
      %1123 = vperm.xlu0 %1122, %v619
      %v1124 = vpop.permute.xlu0 %1123
      %1126 = vset.pattern.permute.xlu0 1
      %1127 = vperm.xlu0 %1126, %v620
      %v1128 = vpop.permute.xlu0 %1127
      %1130 = vset.pattern.permute.xlu0 1
      %1131 = vperm.xlu0 %1130, %v621
      %v1132 = vpop.permute.xlu0 %1131
      %1134 = vset.pattern.permute.xlu0 1
      %1135 = vperm.xlu0 %1134, %v622
      %v1136 = vpop.permute.xlu0 %1135
      %1138 = vset.pattern.permute.xlu0 1
      %1139 = vperm.xlu0 %1138, %v623
      %v1140 = vpop.permute.xlu0 %1139
      %1142 = vset.pattern.permute.xlu0 1
      %1143 = vperm.xlu0 %1142, %v624
      %v1144 = vpop.permute.xlu0 %1143
      %1146 = vset.pattern.permute.xlu0 1
      %1147 = vperm.xlu0 %1146, %v625
      %v1148 = vpop.permute.xlu0 %1147
      %1150 = vset.pattern.permute.xlu0 1
      %1151 = vperm.xlu0 %1150, %v626
      %v1152 = vpop.permute.xlu0 %1151
      %1154 = vset.pattern.permute.xlu0 1
      %1155 = vperm.xlu0 %1154, %v627
      %v1156 = vpop.permute.xlu0 %1155
      %1158 = vset.pattern.permute.xlu0 1
      %1159 = vperm.xlu0 %1158, %v628
      %v1160 = vpop.permute.xlu0 %1159
      %1162 = vset.pattern.permute.xlu0 1
      %1163 = vperm.xlu0 %1162, %v629
      %v1164 = vpop.permute.xlu0 %1163
      %1166 = vset.pattern.permute.xlu0 1
      %1167 = vperm.xlu0 %1166, %v630
      %v1168 = vpop.permute.xlu0 %1167
      %1170 = vset.pattern.permute.xlu0 1
      %1171 = vperm.xlu0 %1170, %v631
      %v1172 = vpop.permute.xlu0 %1171
      %1174 = vset.pattern.permute.xlu0 1
      %1175 = vperm.xlu0 %1174, %v632
      %v1176 = vpop.permute.xlu0 %1175
      %v1178 = vlaneseq
      %v1179 = vshrl.u32 %v1178, 7
      %v1180 = vsub.s32 1, %v1179
      %v1181 = vrot.slane %v894, %v1180
      %v1182 = vmul.f32 %v1116, %v1181
      %v1183 = vmul.f32 %v1120, %v1181
      %v1184 = vmul.f32 %v1124, %v1181
      %v1185 = vmul.f32 %v1128, %v1181
      %v1186 = vmul.f32 %v1132, %v1181
      %v1187 = vmul.f32 %v1136, %v1181
      %v1188 = vmul.f32 %v1140, %v1181
      %v1189 = vmul.f32 %v1144, %v1181
      %v1190 = vmul.f32 %v1148, %v1181
      %v1191 = vmul.f32 %v1152, %v1181
      %v1192 = vmul.f32 %v1156, %v1181
      %v1193 = vmul.f32 %v1160, %v1181
      %v1194 = vmul.f32 %v1164, %v1181
      %v1195 = vmul.f32 %v1168, %v1181
      %v1196 = vmul.f32 %v1172, %v1181
      %v1197 = vmul.f32 %v1176, %v1181
      %v1198 = vadd.f32 %v1002, %v1182
      %v1199 = vadd.f32 %v1003, %v1183
      %v1200 = vadd.f32 %v1004, %v1184
      %v1201 = vadd.f32 %v1005, %v1185
      %v1202 = vadd.f32 %v1006, %v1186
      %v1203 = vadd.f32 %v1007, %v1187
      %v1204 = vadd.f32 %v1008, %v1188
      %v1205 = vadd.f32 %v1009, %v1189
      %v1206 = vadd.f32 %v1010, %v1190
      %v1207 = vadd.f32 %v1011, %v1191
      %v1208 = vadd.f32 %v1012, %v1192
      %v1209 = vadd.f32 %v1013, %v1193
      %v1210 = vadd.f32 %v1014, %v1194
      %v1211 = vadd.f32 %v1015, %v1195
      %v1212 = vadd.f32 %v1016, %v1196
      %v1213 = vadd.f32 %v1017, %v1197
      %1214 = vset.pattern.permute.xlu0 1
      %1215 = vperm.xlu0 %1214, %v780
      %v1216 = vpop.permute.xlu0 %1215
      %1218 = vset.pattern.permute.xlu0 1
      %1219 = vperm.xlu0 %1218, %v781
      %v1220 = vpop.permute.xlu0 %1219
      %1222 = vset.pattern.permute.xlu0 1
      %1223 = vperm.xlu0 %1222, %v782
      %v1224 = vpop.permute.xlu0 %1223
      %1226 = vset.pattern.permute.xlu0 1
      %1227 = vperm.xlu0 %1226, %v783
      %v1228 = vpop.permute.xlu0 %1227
      %1230 = vset.pattern.permute.xlu0 1
      %1231 = vperm.xlu0 %1230, %v784
      %v1232 = vpop.permute.xlu0 %1231
      %1234 = vset.pattern.permute.xlu0 1
      %1235 = vperm.xlu0 %1234, %v785
      %v1236 = vpop.permute.xlu0 %1235
      %1238 = vset.pattern.permute.xlu0 1
      %1239 = vperm.xlu0 %1238, %v786
      %v1240 = vpop.permute.xlu0 %1239
      %1242 = vset.pattern.permute.xlu0 1
      %1243 = vperm.xlu0 %1242, %v787
      %v1244 = vpop.permute.xlu0 %1243
      %1246 = vset.pattern.permute.xlu0 1
      %1247 = vperm.xlu0 %1246, %v788
      %v1248 = vpop.permute.xlu0 %1247
      %1250 = vset.pattern.permute.xlu0 1
      %1251 = vperm.xlu0 %1250, %v789
      %v1252 = vpop.permute.xlu0 %1251
      %1254 = vset.pattern.permute.xlu0 1
      %1255 = vperm.xlu0 %1254, %v790
      %v1256 = vpop.permute.xlu0 %1255
      %1258 = vset.pattern.permute.xlu0 1
      %1259 = vperm.xlu0 %1258, %v791
      %v1260 = vpop.permute.xlu0 %1259
      %1262 = vset.pattern.permute.xlu0 1
      %1263 = vperm.xlu0 %1262, %v792
      %v1264 = vpop.permute.xlu0 %1263
      %1266 = vset.pattern.permute.xlu0 1
      %1267 = vperm.xlu0 %1266, %v793
      %v1268 = vpop.permute.xlu0 %1267
      %1270 = vset.pattern.permute.xlu0 1
      %1271 = vperm.xlu0 %1270, %v794
      %v1272 = vpop.permute.xlu0 %1271
      %1274 = vset.pattern.permute.xlu0 1
      %1275 = vperm.xlu0 %1274, %v795
      %v1276 = vpop.permute.xlu0 %1275
      %v1278 = vmul.f32 %v1216, %v1181
      %v1279 = vmul.f32 %v1220, %v1181
      %v1280 = vmul.f32 %v1224, %v1181
      %v1281 = vmul.f32 %v1228, %v1181
      %v1282 = vmul.f32 %v1232, %v1181
      %v1283 = vmul.f32 %v1236, %v1181
      %v1284 = vmul.f32 %v1240, %v1181
      %v1285 = vmul.f32 %v1244, %v1181
      %v1286 = vmul.f32 %v1248, %v1181
      %v1287 = vmul.f32 %v1252, %v1181
      %v1288 = vmul.f32 %v1256, %v1181
      %v1289 = vmul.f32 %v1260, %v1181
      %v1290 = vmul.f32 %v1264, %v1181
      %v1291 = vmul.f32 %v1268, %v1181
      %v1292 = vmul.f32 %v1272, %v1181
      %v1293 = vmul.f32 %v1276, %v1181
      %v1294 = vadd.f32 %v1098, %v1278
      %v1295 = vadd.f32 %v1099, %v1279
      %v1296 = vadd.f32 %v1100, %v1280
      %v1297 = vadd.f32 %v1101, %v1281
      %v1298 = vadd.f32 %v1102, %v1282
      %v1299 = vadd.f32 %v1103, %v1283
      %v1300 = vadd.f32 %v1104, %v1284
      %v1301 = vadd.f32 %v1105, %v1285
      %v1302 = vadd.f32 %v1106, %v1286
      %v1303 = vadd.f32 %v1107, %v1287
      %v1304 = vadd.f32 %v1108, %v1288
      %v1305 = vadd.f32 %v1109, %v1289
      %v1306 = vadd.f32 %v1110, %v1290
      %v1307 = vadd.f32 %v1111, %v1291
      %v1308 = vadd.f32 %v1112, %v1292
      %v1309 = vadd.f32 %v1113, %v1293
      %1310 = vset.pattern.permute.xlu0 2
      %1311 = vperm.xlu0 %1310, %v617
      %v1312 = vpop.permute.xlu0 %1311
      %1314 = vset.pattern.permute.xlu0 2
      %1315 = vperm.xlu0 %1314, %v618
      %v1316 = vpop.permute.xlu0 %1315
      %1318 = vset.pattern.permute.xlu0 2
      %1319 = vperm.xlu0 %1318, %v619
      %v1320 = vpop.permute.xlu0 %1319
      %1322 = vset.pattern.permute.xlu0 2
      %1323 = vperm.xlu0 %1322, %v620
      %v1324 = vpop.permute.xlu0 %1323
      %1326 = vset.pattern.permute.xlu0 2
      %1327 = vperm.xlu0 %1326, %v621
      %v1328 = vpop.permute.xlu0 %1327
      %1330 = vset.pattern.permute.xlu0 2
      %1331 = vperm.xlu0 %1330, %v622
      %v1332 = vpop.permute.xlu0 %1331
      %1334 = vset.pattern.permute.xlu0 2
      %1335 = vperm.xlu0 %1334, %v623
      %v1336 = vpop.permute.xlu0 %1335
      %1338 = vset.pattern.permute.xlu0 2
      %1339 = vperm.xlu0 %1338, %v624
      %v1340 = vpop.permute.xlu0 %1339
      %1342 = vset.pattern.permute.xlu0 2
      %1343 = vperm.xlu0 %1342, %v625
      %v1344 = vpop.permute.xlu0 %1343
      %1346 = vset.pattern.permute.xlu0 2
      %1347 = vperm.xlu0 %1346, %v626
      %v1348 = vpop.permute.xlu0 %1347
      %1350 = vset.pattern.permute.xlu0 2
      %1351 = vperm.xlu0 %1350, %v627
      %v1352 = vpop.permute.xlu0 %1351
      %1354 = vset.pattern.permute.xlu0 2
      %1355 = vperm.xlu0 %1354, %v628
      %v1356 = vpop.permute.xlu0 %1355
      %1358 = vset.pattern.permute.xlu0 2
      %1359 = vperm.xlu0 %1358, %v629
      %v1360 = vpop.permute.xlu0 %1359
      %1362 = vset.pattern.permute.xlu0 2
      %1363 = vperm.xlu0 %1362, %v630
      %v1364 = vpop.permute.xlu0 %1363
      %1366 = vset.pattern.permute.xlu0 2
      %1367 = vperm.xlu0 %1366, %v631
      %v1368 = vpop.permute.xlu0 %1367
      %1370 = vset.pattern.permute.xlu0 2
      %1371 = vperm.xlu0 %1370, %v632
      %v1372 = vpop.permute.xlu0 %1371
      %v1374 = vlaneseq
      %v1375 = vshrl.u32 %v1374, 7
      %v1376 = vsub.s32 2, %v1375
      %v1377 = vrot.slane %v894, %v1376
      %v1378 = vmul.f32 %v1312, %v1377
      %v1379 = vmul.f32 %v1316, %v1377
      %v1380 = vmul.f32 %v1320, %v1377
      %v1381 = vmul.f32 %v1324, %v1377
      %v1382 = vmul.f32 %v1328, %v1377
      %v1383 = vmul.f32 %v1332, %v1377
      %v1384 = vmul.f32 %v1336, %v1377
      %v1385 = vmul.f32 %v1340, %v1377
      %v1386 = vmul.f32 %v1344, %v1377
      %v1387 = vmul.f32 %v1348, %v1377
      %v1388 = vmul.f32 %v1352, %v1377
      %v1389 = vmul.f32 %v1356, %v1377
      %v1390 = vmul.f32 %v1360, %v1377
      %v1391 = vmul.f32 %v1364, %v1377
      %v1392 = vmul.f32 %v1368, %v1377
      %v1393 = vmul.f32 %v1372, %v1377
      %v1394 = vadd.f32 %v1198, %v1378
      %v1395 = vadd.f32 %v1199, %v1379
      %v1396 = vadd.f32 %v1200, %v1380
      %v1397 = vadd.f32 %v1201, %v1381
      %v1398 = vadd.f32 %v1202, %v1382
      %v1399 = vadd.f32 %v1203, %v1383
      %v1400 = vadd.f32 %v1204, %v1384
      %v1401 = vadd.f32 %v1205, %v1385
      %v1402 = vadd.f32 %v1206, %v1386
      %v1403 = vadd.f32 %v1207, %v1387
      %v1404 = vadd.f32 %v1208, %v1388
      %v1405 = vadd.f32 %v1209, %v1389
      %v1406 = vadd.f32 %v1210, %v1390
      %v1407 = vadd.f32 %v1211, %v1391
      %v1408 = vadd.f32 %v1212, %v1392
      %v1409 = vadd.f32 %v1213, %v1393
      %1410 = vset.pattern.permute.xlu0 2
      %1411 = vperm.xlu0 %1410, %v780
      %v1412 = vpop.permute.xlu0 %1411
      %1414 = vset.pattern.permute.xlu0 2
      %1415 = vperm.xlu0 %1414, %v781
      %v1416 = vpop.permute.xlu0 %1415
      %1418 = vset.pattern.permute.xlu0 2
      %1419 = vperm.xlu0 %1418, %v782
      %v1420 = vpop.permute.xlu0 %1419
      %1422 = vset.pattern.permute.xlu0 2
      %1423 = vperm.xlu0 %1422, %v783
      %v1424 = vpop.permute.xlu0 %1423
      %1426 = vset.pattern.permute.xlu0 2
      %1427 = vperm.xlu0 %1426, %v784
      %v1428 = vpop.permute.xlu0 %1427
      %1430 = vset.pattern.permute.xlu0 2
      %1431 = vperm.xlu0 %1430, %v785
      %v1432 = vpop.permute.xlu0 %1431
      %1434 = vset.pattern.permute.xlu0 2
      %1435 = vperm.xlu0 %1434, %v786
      %v1436 = vpop.permute.xlu0 %1435
      %1438 = vset.pattern.permute.xlu0 2
      %1439 = vperm.xlu0 %1438, %v787
      %v1440 = vpop.permute.xlu0 %1439
      %1442 = vset.pattern.permute.xlu0 2
      %1443 = vperm.xlu0 %1442, %v788
      %v1444 = vpop.permute.xlu0 %1443
      %1446 = vset.pattern.permute.xlu0 2
      %1447 = vperm.xlu0 %1446, %v789
      %v1448 = vpop.permute.xlu0 %1447
      %1450 = vset.pattern.permute.xlu0 2
      %1451 = vperm.xlu0 %1450, %v790
      %v1452 = vpop.permute.xlu0 %1451
      %1454 = vset.pattern.permute.xlu0 2
      %1455 = vperm.xlu0 %1454, %v791
      %v1456 = vpop.permute.xlu0 %1455
      %1458 = vset.pattern.permute.xlu0 2
      %1459 = vperm.xlu0 %1458, %v792
      %v1460 = vpop.permute.xlu0 %1459
      %1462 = vset.pattern.permute.xlu0 2
      %1463 = vperm.xlu0 %1462, %v793
      %v1464 = vpop.permute.xlu0 %1463
      %1466 = vset.pattern.permute.xlu0 2
      %1467 = vperm.xlu0 %1466, %v794
      %v1468 = vpop.permute.xlu0 %1467
      %1470 = vset.pattern.permute.xlu0 2
      %1471 = vperm.xlu0 %1470, %v795
      %v1472 = vpop.permute.xlu0 %1471
      %v1474 = vmul.f32 %v1412, %v1377
      %v1475 = vmul.f32 %v1416, %v1377
      %v1476 = vmul.f32 %v1420, %v1377
      %v1477 = vmul.f32 %v1424, %v1377
      %v1478 = vmul.f32 %v1428, %v1377
      %v1479 = vmul.f32 %v1432, %v1377
      %v1480 = vmul.f32 %v1436, %v1377
      %v1481 = vmul.f32 %v1440, %v1377
      %v1482 = vmul.f32 %v1444, %v1377
      %v1483 = vmul.f32 %v1448, %v1377
      %v1484 = vmul.f32 %v1452, %v1377
      %v1485 = vmul.f32 %v1456, %v1377
      %v1486 = vmul.f32 %v1460, %v1377
      %v1487 = vmul.f32 %v1464, %v1377
      %v1488 = vmul.f32 %v1468, %v1377
      %v1489 = vmul.f32 %v1472, %v1377
      %v1490 = vadd.f32 %v1294, %v1474
      %v1491 = vadd.f32 %v1295, %v1475
      %v1492 = vadd.f32 %v1296, %v1476
      %v1493 = vadd.f32 %v1297, %v1477
      %v1494 = vadd.f32 %v1298, %v1478
      %v1495 = vadd.f32 %v1299, %v1479
      %v1496 = vadd.f32 %v1300, %v1480
      %v1497 = vadd.f32 %v1301, %v1481
      %v1498 = vadd.f32 %v1302, %v1482
      %v1499 = vadd.f32 %v1303, %v1483
      %v1500 = vadd.f32 %v1304, %v1484
      %v1501 = vadd.f32 %v1305, %v1485
      %v1502 = vadd.f32 %v1306, %v1486
      %v1503 = vadd.f32 %v1307, %v1487
      %v1504 = vadd.f32 %v1308, %v1488
      %v1505 = vadd.f32 %v1309, %v1489
      %1506 = vset.pattern.permute.xlu0 3
      %1507 = vperm.xlu0 %1506, %v617
      %v1508 = vpop.permute.xlu0 %1507
      %1510 = vset.pattern.permute.xlu0 3
      %1511 = vperm.xlu0 %1510, %v618
      %v1512 = vpop.permute.xlu0 %1511
      %1514 = vset.pattern.permute.xlu0 3
      %1515 = vperm.xlu0 %1514, %v619
      %v1516 = vpop.permute.xlu0 %1515
      %1518 = vset.pattern.permute.xlu0 3
      %1519 = vperm.xlu0 %1518, %v620
      %v1520 = vpop.permute.xlu0 %1519
      %1522 = vset.pattern.permute.xlu0 3
      %1523 = vperm.xlu0 %1522, %v621
      %v1524 = vpop.permute.xlu0 %1523
      %1526 = vset.pattern.permute.xlu0 3
      %1527 = vperm.xlu0 %1526, %v622
      %v1528 = vpop.permute.xlu0 %1527
      %1530 = vset.pattern.permute.xlu0 3
      %1531 = vperm.xlu0 %1530, %v623
      %v1532 = vpop.permute.xlu0 %1531
      %1534 = vset.pattern.permute.xlu0 3
      %1535 = vperm.xlu0 %1534, %v624
      %v1536 = vpop.permute.xlu0 %1535
      %1538 = vset.pattern.permute.xlu0 3
      %1539 = vperm.xlu0 %1538, %v625
      %v1540 = vpop.permute.xlu0 %1539
      %1542 = vset.pattern.permute.xlu0 3
      %1543 = vperm.xlu0 %1542, %v626
      %v1544 = vpop.permute.xlu0 %1543
      %1546 = vset.pattern.permute.xlu0 3
      %1547 = vperm.xlu0 %1546, %v627
      %v1548 = vpop.permute.xlu0 %1547
      %1550 = vset.pattern.permute.xlu0 3
      %1551 = vperm.xlu0 %1550, %v628
      %v1552 = vpop.permute.xlu0 %1551
      %1554 = vset.pattern.permute.xlu0 3
      %1555 = vperm.xlu0 %1554, %v629
      %v1556 = vpop.permute.xlu0 %1555
      %1558 = vset.pattern.permute.xlu0 3
      %1559 = vperm.xlu0 %1558, %v630
      %v1560 = vpop.permute.xlu0 %1559
      %1562 = vset.pattern.permute.xlu0 3
      %1563 = vperm.xlu0 %1562, %v631
      %v1564 = vpop.permute.xlu0 %1563
      %1566 = vset.pattern.permute.xlu0 3
      %1567 = vperm.xlu0 %1566, %v632
      %v1568 = vpop.permute.xlu0 %1567
      %v1570 = vlaneseq
      %v1571 = vshrl.u32 %v1570, 7
      %v1572 = vsub.s32 3, %v1571
      %v1573 = vrot.slane %v894, %v1572
      %v1574 = vmul.f32 %v1508, %v1573
      %v1575 = vmul.f32 %v1512, %v1573
      %v1576 = vmul.f32 %v1516, %v1573
      %v1577 = vmul.f32 %v1520, %v1573
      %v1578 = vmul.f32 %v1524, %v1573
      %v1579 = vmul.f32 %v1528, %v1573
      %v1580 = vmul.f32 %v1532, %v1573
      %v1581 = vmul.f32 %v1536, %v1573
      %v1582 = vmul.f32 %v1540, %v1573
      %v1583 = vmul.f32 %v1544, %v1573
      %v1584 = vmul.f32 %v1548, %v1573
      %v1585 = vmul.f32 %v1552, %v1573
      %v1586 = vmul.f32 %v1556, %v1573
      %v1587 = vmul.f32 %v1560, %v1573
      %v1588 = vmul.f32 %v1564, %v1573
      %v1589 = vmul.f32 %v1568, %v1573
      %v1590 = vadd.f32 %v1394, %v1574
      %v1591 = vadd.f32 %v1395, %v1575
      %v1592 = vadd.f32 %v1396, %v1576
      %v1593 = vadd.f32 %v1397, %v1577
      %v1594 = vadd.f32 %v1398, %v1578
      %v1595 = vadd.f32 %v1399, %v1579
      %v1596 = vadd.f32 %v1400, %v1580
      %v1597 = vadd.f32 %v1401, %v1581
      %v1598 = vadd.f32 %v1402, %v1582
      %v1599 = vadd.f32 %v1403, %v1583
      %v1600 = vadd.f32 %v1404, %v1584
      %v1601 = vadd.f32 %v1405, %v1585
      %v1602 = vadd.f32 %v1406, %v1586
      %v1603 = vadd.f32 %v1407, %v1587
      %v1604 = vadd.f32 %v1408, %v1588
      %v1605 = vadd.f32 %v1409, %v1589
      %1606 = vset.pattern.permute.xlu0 3
      %1607 = vperm.xlu0 %1606, %v780
      %v1608 = vpop.permute.xlu0 %1607
      %1610 = vset.pattern.permute.xlu0 3
      %1611 = vperm.xlu0 %1610, %v781
      %v1612 = vpop.permute.xlu0 %1611
      %1614 = vset.pattern.permute.xlu0 3
      %1615 = vperm.xlu0 %1614, %v782
      %v1616 = vpop.permute.xlu0 %1615
      %1618 = vset.pattern.permute.xlu0 3
      %1619 = vperm.xlu0 %1618, %v783
      %v1620 = vpop.permute.xlu0 %1619
      %1622 = vset.pattern.permute.xlu0 3
      %1623 = vperm.xlu0 %1622, %v784
      %v1624 = vpop.permute.xlu0 %1623
      %1626 = vset.pattern.permute.xlu0 3
      %1627 = vperm.xlu0 %1626, %v785
      %v1628 = vpop.permute.xlu0 %1627
      %1630 = vset.pattern.permute.xlu0 3
      %1631 = vperm.xlu0 %1630, %v786
      %v1632 = vpop.permute.xlu0 %1631
      %1634 = vset.pattern.permute.xlu0 3
      %1635 = vperm.xlu0 %1634, %v787
      %v1636 = vpop.permute.xlu0 %1635
      %1638 = vset.pattern.permute.xlu0 3
      %1639 = vperm.xlu0 %1638, %v788
      %v1640 = vpop.permute.xlu0 %1639
      %1642 = vset.pattern.permute.xlu0 3
      %1643 = vperm.xlu0 %1642, %v789
      %v1644 = vpop.permute.xlu0 %1643
      %1646 = vset.pattern.permute.xlu0 3
      %1647 = vperm.xlu0 %1646, %v790
      %v1648 = vpop.permute.xlu0 %1647
      %1650 = vset.pattern.permute.xlu0 3
      %1651 = vperm.xlu0 %1650, %v791
      %v1652 = vpop.permute.xlu0 %1651
      %1654 = vset.pattern.permute.xlu0 3
      %1655 = vperm.xlu0 %1654, %v792
      %v1656 = vpop.permute.xlu0 %1655
      %1658 = vset.pattern.permute.xlu0 3
      %1659 = vperm.xlu0 %1658, %v793
      %v1660 = vpop.permute.xlu0 %1659
      %1662 = vset.pattern.permute.xlu0 3
      %1663 = vperm.xlu0 %1662, %v794
      %v1664 = vpop.permute.xlu0 %1663
      %1666 = vset.pattern.permute.xlu0 3
      %1667 = vperm.xlu0 %1666, %v795
      %v1668 = vpop.permute.xlu0 %1667
      %v1670 = vmul.f32 %v1608, %v1573
      %v1671 = vmul.f32 %v1612, %v1573
      %v1672 = vmul.f32 %v1616, %v1573
      %v1673 = vmul.f32 %v1620, %v1573
      %v1674 = vmul.f32 %v1624, %v1573
      %v1675 = vmul.f32 %v1628, %v1573
      %v1676 = vmul.f32 %v1632, %v1573
      %v1677 = vmul.f32 %v1636, %v1573
      %v1678 = vmul.f32 %v1640, %v1573
      %v1679 = vmul.f32 %v1644, %v1573
      %v1680 = vmul.f32 %v1648, %v1573
      %v1681 = vmul.f32 %v1652, %v1573
      %v1682 = vmul.f32 %v1656, %v1573
      %v1683 = vmul.f32 %v1660, %v1573
      %v1684 = vmul.f32 %v1664, %v1573
      %v1685 = vmul.f32 %v1668, %v1573
      %v1686 = vadd.f32 %v1490, %v1670
      %v1687 = vadd.f32 %v1491, %v1671
      %v1688 = vadd.f32 %v1492, %v1672
      %v1689 = vadd.f32 %v1493, %v1673
      %v1690 = vadd.f32 %v1494, %v1674
      %v1691 = vadd.f32 %v1495, %v1675
      %v1692 = vadd.f32 %v1496, %v1676
      %v1693 = vadd.f32 %v1497, %v1677
      %v1694 = vadd.f32 %v1498, %v1678
      %v1695 = vadd.f32 %v1499, %v1679
      %v1696 = vadd.f32 %v1500, %v1680
      %v1697 = vadd.f32 %v1501, %v1681
      %v1698 = vadd.f32 %v1502, %v1682
      %v1699 = vadd.f32 %v1503, %v1683
      %v1700 = vadd.f32 %v1504, %v1684
      %v1701 = vadd.f32 %v1505, %v1685
      %v1702 = vmax.f32 %v1590, 0.0
      %v1703 = vmax.f32 %v1591, 0.0
      %v1704 = vmax.f32 %v1592, 0.0
      %v1705 = vmax.f32 %v1593, 0.0
      %v1706 = vmax.f32 %v1594, 0.0
      %v1707 = vmax.f32 %v1595, 0.0
      %v1708 = vmax.f32 %v1596, 0.0
      %v1709 = vmax.f32 %v1597, 0.0
      %v1710 = vmax.f32 %v1598, 0.0
      %v1711 = vmax.f32 %v1599, 0.0
      %v1712 = vmax.f32 %v1600, 0.0
      %v1713 = vmax.f32 %v1601, 0.0
      %v1714 = vmax.f32 %v1602, 0.0
      %v1715 = vmax.f32 %v1603, 0.0
      %v1716 = vmax.f32 %v1604, 0.0
      %v1717 = vmax.f32 %v1605, 0.0
      %v1718 = vmax.f32 %v1686, 0.0
      %v1719 = vmax.f32 %v1687, 0.0
      %v1720 = vmax.f32 %v1688, 0.0
      %v1721 = vmax.f32 %v1689, 0.0
      %v1722 = vmax.f32 %v1690, 0.0
      %v1723 = vmax.f32 %v1691, 0.0
      %v1724 = vmax.f32 %v1692, 0.0
      %v1725 = vmax.f32 %v1693, 0.0
      %v1726 = vmax.f32 %v1694, 0.0
      %v1727 = vmax.f32 %v1695, 0.0
      %v1728 = vmax.f32 %v1696, 0.0
      %v1729 = vmax.f32 %v1697, 0.0
      %v1730 = vmax.f32 %v1698, 0.0
      %v1731 = vmax.f32 %v1699, 0.0
      %v1732 = vmax.f32 %v1700, 0.0
      %v1733 = vmax.f32 %v1701, 0.0
      %v1734 = vmax.f32 %v1702, %v1718
      %v1735 = vmax.f32 %v1703, %v1719
      %v1736 = vmax.f32 %v1704, %v1720
      %v1737 = vmax.f32 %v1705, %v1721
      %v1738 = vmax.f32 %v1706, %v1722
      %v1739 = vmax.f32 %v1707, %v1723
      %v1740 = vmax.f32 %v1708, %v1724
      %v1741 = vmax.f32 %v1709, %v1725
      %v1742 = vmax.f32 %v1710, %v1726
      %v1743 = vmax.f32 %v1711, %v1727
      %v1744 = vmax.f32 %v1712, %v1728
      %v1745 = vmax.f32 %v1713, %v1729
      %v1746 = vmax.f32 %v1714, %v1730
      %v1747 = vmax.f32 %v1715, %v1731
      %v1748 = vmax.f32 %v1716, %v1732
      %v1749 = vmax.f32 %v1717, %v1733
      %v1750 = vmax.f32 %v1734, %v1735
      %v1751 = vmax.f32 %v1736, %v1737
      %v1752 = vmax.f32 %v1738, %v1739
      %v1753 = vmax.f32 %v1740, %v1741
      %v1754 = vmax.f32 %v1742, %v1743
      %v1755 = vmax.f32 %v1744, %v1745
      %v1756 = vmax.f32 %v1746, %v1747
      %v1757 = vmax.f32 %v1748, %v1749
      %1758 = vst.msk [vmem:[%s237] sm:$0xff] %vm877, %v1750
      %1759 = vst.msk [vmem:[%s237 + $0x8] sm:$0xff] %vm877, %v1751
      %1760 = vst.msk [vmem:[%s237 + $0x10] sm:$0xff] %vm877, %v1752
      %1761 = vst.msk [vmem:[%s237 + $0x18] sm:$0xff] %vm877, %v1753
      %1762 = vst.msk [vmem:[%s237 + $0x20] sm:$0xff] %vm877, %v1754
      %1763 = vst.msk [vmem:[%s237 + $0x28] sm:$0xff] %vm877, %v1755
      %1764 = vst.msk [vmem:[%s237 + $0x30] sm:$0xff] %vm877, %v1756
      %1765 = vst.msk [vmem:[%s237 + $0x38] sm:$0xff] %vm877, %v1757
      %p1766 = scmp.lt.s32.totalorder %s17, 1
      %s1767 = scalar_select %p1766, %s17, 1
      %s1768 = smul.addr %s1767, 16
      %s1769 = smul.addr %s1768, 8
      %s1770 = scalar_lea.vmem %s4, %s1769
      %p1771 = scmp.lt.s32.totalorder %s17, 1
      %s1772 = scalar_select %p1771, %s17, 1
      %s1773 = smul.addr %s1772, 8
      %s1774 = smul.addr %s1773, 8
      %s1775 = scalar_lea.vmem %s5, %s1774
      // Predicated region
      $region37: #{encoder_block_mamba2.1} parent=35 // pred_check
        %p1776 = pneg %p124
      $region38: #{encoder_block_mamba2.1} parent=35 // pred_check_branch
        %1778 = sbr.rel (%p1776) target = $region40
      $region39: #{encoder_block_mamba2.1} parent=35 // pred_region
        _
      $region40: #{encoder_block_mamba2.1} parent=35 // pred_fallthru
        _
      // Predicated region
      $region41: #{encoder_block_mamba2.1} parent=35 // pred_check
        %p1779 = pneg %p150
      $region42: #{encoder_block_mamba2.1} parent=35 // pred_check_branch
        %1781 = sbr.rel (%p1779) target = $region44
      $region43: #{encoder_block_mamba2.1} parent=35 // pred_region
        _
      $region44: #{encoder_block_mamba2.1} parent=35 // pred_fallthru
        _
    $region36: #{encoder_block_mamba2.1} parent=5 // pred_fallthru
      _
    %p1782 = scmp.le.s32.totalorder 2, %s12
    // Predicated region
    $region45: #{encoder_block_mamba2.1} parent=5 // pred_check
      %p1783 = pneg %p1782
    $region46: #{encoder_block_mamba2.1} parent=5 // pred_check_branch
      %1785 = sbr.rel (%p1783) target = $region48
    $region47: #{encoder_block_mamba2.1} parent=5 // pred_region
      %s1786 = ssub.s32 %s12, 2
      // Predicated region
      $region49: #{encoder_block_mamba2.1} parent=47 // pred_check
        %p1787 = pneg %p130
      $region50: #{encoder_block_mamba2.1} parent=47 // pred_check_branch
        %1789 = sbr.rel (%p1787) target = $region52
      $region51: #{encoder_block_mamba2.1} parent=47 // pred_region
        %p1790 = scmp.lt.s32.totalorder %s18, 1
        %s1791 = scalar_select %p1790, %s18, 1
        %s1792 = smul.addr %s1791, 16
        %s1793 = smul.addr %s1792, 8
        %s1794 = scalar_lea.vmem %s4, %s1793
      $region52: #{encoder_block_mamba2.1} parent=47 // pred_fallthru
        _
      // Predicated region
      $region53: #{encoder_block_mamba2.1} parent=47 // pred_check
        %p1795 = pneg %p156
      $region54: #{encoder_block_mamba2.1} parent=47 // pred_check_branch
        %1797 = sbr.rel (%p1795) target = $region56
      $region55: #{encoder_block_mamba2.1} parent=47 // pred_region
        %p1798 = scmp.lt.s32.totalorder %s18, 1
        %s1799 = scalar_select %p1798, %s18, 1
        %s1800 = smul.addr %s1799, 8
        %s1801 = smul.addr %s1800, 8
        %s1802 = scalar_lea.vmem %s5, %s1801
      $region56: #{encoder_block_mamba2.1} parent=47 // pred_fallthru
        _
    $region48: #{encoder_block_mamba2.1} parent=5 // pred_fallthru
      _
  $region6: #{encoder_block_mamba2.1} parent=0 // loop_footer
    %s16 = sadd.s32 1, %s12
  $region7: #{encoder_block_mamba2.1} parent=0 // loop_footer_branch
    %11 = sbr.rel target = $region3
  $region8: #{encoder_block_mamba2.1} parent=0 // loop_exit
    _

</llo_original>
